<compile_context>
chip_gen: v5e
topology: v5e:2x2
jax: 0.10.0
libtpu: 0.0.40
codegen_flags: <defaults>
</compile_context>

<pallas_src>
import jax
import jax.numpy as jnp
from jax.experimental import pallas as pl
from jax.experimental.pallas import tpu as pltpu


def _tree_sum(xs):
    """Balanced pairwise sum of a Python list of arrays (breaks add chains)."""
    xs = list(xs)
    while len(xs) > 1:
        nxt = [xs[i] + xs[i + 1] for i in range(0, len(xs) - 1, 2)]
        if len(xs) % 2:
            nxt.append(xs[-1])
        xs = nxt
    return xs[0]


def _make_resblock_kernel(H, W, NB, C_in, C_out, res_scale):
    """Kernel for one block of NB images laid out as a (C, NB*H*W) tile."""
    P = H * W
    L = NB * P
    # Flattened source offset of tap k = dy*3 + dx (3x3, same padding).
    shifts = [(dy - 1) * W + (dx - 1) for dy in range(3) for dx in range(3)]

    def conv3x3(inp, w, b, cin, masks):
        """(cin, L) -> (C_out, L), exact f32 on the VPU.

        Taps are built one at a time (bounded vreg live ranges); the 9*cin
        broadcast FMAs round-robin over 4 independent accumulators so the four
        VALU slots can co-issue instead of serializing on one add chain.
        """
        n_acc = min(4, 9 * cin)
        accs = [None] * n_acc
        for k, s in enumerate(shifts):
            if s == 0:
                tap = inp                                   # center tap: no shift, no mask
            else:
                # tap[:, q] = inp[:, q + s]; cross-image / out-of-image reads
                # are exactly the positions zeroed by the edge mask.
                tap = pltpu.roll(inp, shift=(-s) % L, axis=1) * masks[k]
            for ci in range(cin):
                col = k * cin + ci
                prod = w[:, col:col + 1] * tap[ci:ci + 1, :]     # (C_out, L) broadcast FMA
                j = (k * cin + ci) % n_acc
                accs[j] = prod if accs[j] is None else accs[j] + prod
        return _tree_sum([a for a in accs if a is not None]) + b  # bias: (C_out, 1)

    def kernel(masks_ref, x_ref, w1_ref, b1_ref, w2_ref, b2_ref, o_ref):
        # Small constant operands: loaded once per grid step, outside any loop.
        m_all = masks_ref[...]                              # (8, L)
        masks, r = {}, 0
        for k, s in enumerate(shifts):
            if s != 0:
                masks[k] = m_all[r:r + 1, :]                # (1, L) edge mask for tap k
                r += 1

        x = x_ref[...]                                      # (C_in, L)
        w1 = w1_ref[...]
        b1 = b1_ref[...]
        w2 = w2_ref[...]
        b2 = b2_ref[...]

        h = jnp.maximum(conv3x3(x, w1, b1, C_in, masks), 0.0)   # conv1 + ReLU
        y = conv3x3(h, w2, b2, C_out, masks)                    # conv2
        if res_scale != 1.0:                                # trace-time skip when == 1
            y = y * res_scale
        y = y + x                                           # residual
        o_ref[...] = y if y.dtype == o_ref.dtype else y.astype(o_ref.dtype)

    return kernel


def _choose_images_per_block(N, C, P):
    """Largest batch block that fits a conservative VMEM budget; >=2 grid steps on v7x."""
    itemsize = 4
    budget = 24 << 20  # leaves headroom even on v7x's 64 MiB/TC

    def feasible(nb):
        if N % nb != 0:
            return False
        if nb < N and (nb * P) % 128 != 0:
            return False  # keep block lane axis a multiple of 128 unless it spans the batch
        act = C * nb * P * itemsize
        msk = 8 * nb * P * itemsize
        return 2 * (2 * act) + 2 * msk <= budget  # in+out double-buffered + masks

    cands = [d for d in range(1, N + 1) if feasible(d)]
    if not cands:
        return N  # fall back to a single full-batch block (shape-legal by construction)
    nb = max(cands)  # coarse grid: best for single-TC v5e / v6e
    try:
        if "v7" in jax.devices()[0].device_kind.lower():
            multi = [d for d in cands if N // d >= 2]  # shard across both TensorCores
            if multi:
                nb = max(multi)
    except Exception:
        pass
    return nb


def resblock_pallas(x_nchw, w1, b1, w2, b2, res_scale=1.0, images_per_block=None):
    """x_nchw: (N, C, H, W) f32.  w1/w2: (Cout, Cin, 3, 3).  b1/b2: (Cout,)."""
    N, C_in, H, W = x_nchw.shape
    C_out = w1.shape[0]
    assert C_in == C_out, "residual add requires in_channels == out_channels"
    assert W >= 2, "W >= 2 required so only the center tap has zero shift"
    P = H * W

    NB = (_choose_images_per_block(N, C_in, P)
          if images_per_block is None else images_per_block)
    assert N % NB == 0, "images_per_block must divide the batch"
    L = NB * P

    # Activations: (N, C, H, W) -> (C, N*P), images side by side on the lane axis.
    # (Tiny wrapper-side transpose; for production fold it into the producer or
    # use a grid-over-images variant.)
    x_flat = jnp.transpose(x_nchw.reshape(N, C_in, P).astype(jnp.float32),
                           (1, 0, 2)).reshape(C_in, N * P)

    # Weights: (Cout, Cin, 3, 3) -> (Cout, 9*Cin); column index (dy*3+dx)*Cin + ci.
    w1m = jnp.transpose(w1, (0, 2, 3, 1)).reshape(C_out, 9 * C_in).astype(jnp.float32)
    w2m = jnp.transpose(w2, (0, 2, 3, 1)).reshape(C_out, 9 * C_out).astype(jnp.float32)
    b1c = b1.reshape(C_out, 1).astype(jnp.float32)
    b2c = b2.reshape(C_out, 1).astype(jnp.float32)

    # Edge masks for the 8 non-center taps, packed as ONE lane-dense (8, L) array.
    pos = jnp.arange(P, dtype=jnp.int32)
    row, col = pos // W, pos % W
    mrows = []
    for dy in range(3):
        for dx in range(3):
            if (dy - 1) * W + (dx - 1) == 0:
                continue  # center tap needs no mask
            valid = ((row + dy - 1) >= 0) & ((row + dy - 1) < H) & \
                    ((col + dx - 1) >= 0) & ((col + dx - 1) < W)
            mrows.append(valid)
    masks = jnp.tile(jnp.stack(mrows).astype(jnp.float32), (1, NB))  # (8, L)

    # VMEM budgeting: only raise the scoped limit if the footprint needs it.
    blk_bytes = C_in * L * 4
    footprint = (2 * (2 * blk_bytes)          # input + output blocks, double-buffered
                 + 2 * (8 * L * 4)            # masks
                 + 4 * (w1m.size + w2m.size + b1c.size + b2c.size))
    vmem_limit = None
    if footprint > (12 << 20):
        vmem_limit = int(min(footprint + (8 << 20), 48 << 20))

    kernel = _make_resblock_kernel(H, W, NB, C_in, C_out, float(res_scale))

    out_flat = pl.pallas_call(
        kernel,
        out_shape=jax.ShapeDtypeStruct((C_out, N * P), jnp.float32),
        grid_spec=pltpu.PrefetchScalarGridSpec(
            num_scalar_prefetch=0,
            grid=(N // NB,),
            in_specs=[
                pl.BlockSpec((8, L), lambda i: (0, 0)),                # edge masks (invariant)
                pl.BlockSpec((C_in, L), lambda i: (0, i)),             # x block (NB images on lanes)
                pl.BlockSpec((C_out, 9 * C_in), lambda i: (0, 0)),     # w1 (invariant)
                pl.BlockSpec((C_out, 1), lambda i: (0, 0)),            # b1
                pl.BlockSpec((C_out, 9 * C_out), lambda i: (0, 0)),    # w2
                pl.BlockSpec((C_out, 1), lambda i: (0, 0)),            # b2
            ],
            out_specs=pl.BlockSpec((C_out, L), lambda i: (0, i)),
        ),
        compiler_params=pltpu.CompilerParams(
            dimension_semantics=("parallel",),
            vmem_limit_bytes=vmem_limit),
    )(masks, x_flat, w1m, b1c, w2m, b2c)

    return (out_flat.reshape(C_out, N, P)
            .transpose(1, 0, 2)
            .reshape(N, C_out, H, W))


def resblock_reference(x_nchw, w1, b1, w2, b2, res_scale=1.0):
    """Pure-JAX reference (lax.conv, HIGHEST precision) for correctness checking."""
    dn = jax.lax.conv_dimension_numbers(x_nchw.shape, w1.shape,
                                        ("NCHW", "OIHW", "NCHW"))
    out = jax.lax.conv_general_dilated(x_nchw, w1, (1, 1), ((1, 1), (1, 1)),
                                       dimension_numbers=dn,
                                       precision=jax.lax.Precision.HIGHEST)
    out = out + b1.reshape(1, -1, 1, 1)
    out = jnp.maximum(out, 0.0)
    out = jax.lax.conv_general_dilated(out, w2, (1, 1), ((1, 1), (1, 1)),
                                       dimension_numbers=dn,
                                       precision=jax.lax.Precision.HIGHEST)
    out = out + b2.reshape(1, -1, 1, 1)
    return out * res_scale + x_nchw


if __name__ == "__main__":
    # Small shapes consistent with the module: ResBlock(4, 4), input (2, 4, 16, 16).
    N, C, H, W = 2, 4, 16, 16
    res_scale = 1.0

    key = jax.random.PRNGKey(0)
    kx, kw1, kb1, kw2, kb2 = jax.random.split(key, 5)

    x = jax.random.normal(kx, (N, C, H, W), dtype=jnp.float32)
    fan_in = C * 3 * 3
    w1 = jax.random.normal(kw1, (C, C, 3, 3), dtype=jnp.float32) / jnp.sqrt(fan_in)
    b1 = jax.random.normal(kb1, (C,), dtype=jnp.float32) * 0.1
    w2 = jax.random.normal(kw2, (C, C, 3, 3), dtype=jnp.float32) / jnp.sqrt(fan_in)
    b2 = jax.random.normal(kb2, (C,), dtype=jnp.float32) * 0.1

    out = resblock_pallas(x, w1, b1, w2, b2, res_scale)
    out = jax.block_until_ready(out)

    ref = resblock_reference(x, w1, b1, w2, b2, res_scale)
    assert out.shape == (N, C, H, W)
    assert jnp.allclose(out, ref, atol=1e-3, rtol=1e-3), "mismatch vs reference"

    print("KERNEL_OK")
</pallas_src>

<mosaic_0001>
module attributes {stable_mosaic.version = 11 : i64} {
  func.func @kernel(%arg0: i32, %arg1: memref<8x512xf32, #tpu.memory_space<vmem>>, %arg2: memref<4x512xf32, #tpu.memory_space<vmem>>, %arg3: memref<4x36xf32, #tpu.memory_space<vmem>>, %arg4: memref<4x1xf32, #tpu.memory_space<vmem>>, %arg5: memref<4x36xf32, #tpu.memory_space<vmem>>, %arg6: memref<4x1xf32, #tpu.memory_space<vmem>>, %arg7: memref<4x512xf32, #tpu.memory_space<vmem>>) attributes {dimension_semantics = [#tpu.dimension_semantics<parallel>], iteration_bounds = array<i64: 1>, scalar_prefetch = 0 : i64, scratch_operands = 0 : i64, tpu.core_type = #tpu.core_type<tc>, window_params = [{pipeline_mode = #tpu.pipeline_mode<synchronous>, transform_indices = @transform_0, window_bounds = array<i64: 8, 512>}, {transform_indices = @transform_1, window_bounds = array<i64: 4, 512>}, {pipeline_mode = #tpu.pipeline_mode<synchronous>, transform_indices = @transform_2, window_bounds = array<i64: 4, 36>}, {pipeline_mode = #tpu.pipeline_mode<synchronous>, transform_indices = @transform_3, window_bounds = array<i64: 4, 1>}, {pipeline_mode = #tpu.pipeline_mode<synchronous>, transform_indices = @transform_4, window_bounds = array<i64: 4, 36>}, {pipeline_mode = #tpu.pipeline_mode<synchronous>, transform_indices = @transform_5, window_bounds = array<i64: 4, 1>}, {transform_indices = @transform_6, window_bounds = array<i64: 4, 512>}]} {
    %c0 = arith.constant 0 : index
    %c0_0 = arith.constant 0 : index
    %0 = vector.load %arg1[%c0, %c0_0] : memref<8x512xf32, #tpu.memory_space<vmem>>, vector<8x512xf32>
    %1 = vector.extract_strided_slice %0 {offsets = [0, 0], sizes = [1, 512], strides = [1, 1]} : vector<8x512xf32> to vector<1x512xf32>
    %2 = vector.extract_strided_slice %0 {offsets = [1, 0], sizes = [1, 512], strides = [1, 1]} : vector<8x512xf32> to vector<1x512xf32>
    %3 = vector.extract_strided_slice %0 {offsets = [2, 0], sizes = [1, 512], strides = [1, 1]} : vector<8x512xf32> to vector<1x512xf32>
    %4 = vector.extract_strided_slice %0 {offsets = [3, 0], sizes = [1, 512], strides = [1, 1]} : vector<8x512xf32> to vector<1x512xf32>
    %5 = vector.extract_strided_slice %0 {offsets = [4, 0], sizes = [1, 512], strides = [1, 1]} : vector<8x512xf32> to vector<1x512xf32>
    %6 = vector.extract_strided_slice %0 {offsets = [5, 0], sizes = [1, 512], strides = [1, 1]} : vector<8x512xf32> to vector<1x512xf32>
    %7 = vector.extract_strided_slice %0 {offsets = [6, 0], sizes = [1, 512], strides = [1, 1]} : vector<8x512xf32> to vector<1x512xf32>
    %8 = vector.extract_strided_slice %0 {offsets = [7, 0], sizes = [1, 512], strides = [1, 1]} : vector<8x512xf32> to vector<1x512xf32>
    %c0_1 = arith.constant 0 : index
    %c0_2 = arith.constant 0 : index
    %9 = vector.load %arg2[%c0_1, %c0_2] : memref<4x512xf32, #tpu.memory_space<vmem>>, vector<4x512xf32>
    %c0_3 = arith.constant 0 : index
    %c0_4 = arith.constant 0 : index
    %10 = vector.load %arg3[%c0_3, %c0_4] : memref<4x36xf32, #tpu.memory_space<vmem>>, vector<4x36xf32>
    %c0_5 = arith.constant 0 : index
    %c0_6 = arith.constant 0 : index
    %11 = vector.load %arg4[%c0_5, %c0_6] : memref<4x1xf32, #tpu.memory_space<vmem>>, vector<4x1xf32>
    %c0_7 = arith.constant 0 : index
    %c0_8 = arith.constant 0 : index
    %12 = vector.load %arg5[%c0_7, %c0_8] : memref<4x36xf32, #tpu.memory_space<vmem>>, vector<4x36xf32>
    %c0_9 = arith.constant 0 : index
    %c0_10 = arith.constant 0 : index
    %13 = vector.load %arg6[%c0_9, %c0_10] : memref<4x1xf32, #tpu.memory_space<vmem>>, vector<4x1xf32>
    %c17_i32 = arith.constant 17 : i32
    %14 = tpu.dynamic_rotate %9 by %c17_i32 dim 1 : vector<4x512xf32>, i32 -> vector<4x512xf32>
    %15 = vector.broadcast %1 : vector<1x512xf32> to vector<4x512xf32>
    %16 = arith.mulf %14, %15 : vector<4x512xf32>
    %17 = vector.extract_strided_slice %10 {offsets = [0, 0], sizes = [4, 1], strides = [1, 1]} : vector<4x36xf32> to vector<4x1xf32>
    %18 = vector.extract_strided_slice %16 {offsets = [0, 0], sizes = [1, 512], strides = [1, 1]} : vector<4x512xf32> to vector<1x512xf32>
    %19 = vector.broadcast %17 : vector<4x1xf32> to vector<4x512xf32>
    %20 = vector.broadcast %18 : vector<1x512xf32> to vector<4x512xf32>
    %21 = arith.mulf %19, %20 : vector<4x512xf32>
    %22 = vector.extract_strided_slice %10 {offsets = [0, 1], sizes = [4, 1], strides = [1, 1]} : vector<4x36xf32> to vector<4x1xf32>
    %23 = vector.extract_strided_slice %16 {offsets = [1, 0], sizes = [1, 512], strides = [1, 1]} : vector<4x512xf32> to vector<1x512xf32>
    %24 = vector.broadcast %22 : vector<4x1xf32> to vector<4x512xf32>
    %25 = vector.broadcast %23 : vector<1x512xf32> to vector<4x512xf32>
    %26 = arith.mulf %24, %25 : vector<4x512xf32>
    %27 = vector.extract_strided_slice %10 {offsets = [0, 2], sizes = [4, 1], strides = [1, 1]} : vector<4x36xf32> to vector<4x1xf32>
    %28 = vector.extract_strided_slice %16 {offsets = [2, 0], sizes = [1, 512], strides = [1, 1]} : vector<4x512xf32> to vector<1x512xf32>
    %29 = vector.broadcast %27 : vector<4x1xf32> to vector<4x512xf32>
    %30 = vector.broadcast %28 : vector<1x512xf32> to vector<4x512xf32>
    %31 = arith.mulf %29, %30 : vector<4x512xf32>
    %32 = vector.extract_strided_slice %10 {offsets = [0, 3], sizes = [4, 1], strides = [1, 1]} : vector<4x36xf32> to vector<4x1xf32>
    %33 = vector.extract_strided_slice %16 {offsets = [3, 0], sizes = [1, 512], strides = [1, 1]} : vector<4x512xf32> to vector<1x512xf32>
    %34 = vector.broadcast %32 : vector<4x1xf32> to vector<4x512xf32>
    %35 = vector.broadcast %33 : vector<1x512xf32> to vector<4x512xf32>
    %36 = arith.mulf %34, %35 : vector<4x512xf32>
    %c16_i32 = arith.constant 16 : i32
    %37 = tpu.dynamic_rotate %9 by %c16_i32 dim 1 : vector<4x512xf32>, i32 -> vector<4x512xf32>
    %38 = vector.broadcast %2 : vector<1x512xf32> to vector<4x512xf32>
    %39 = arith.mulf %37, %38 : vector<4x512xf32>
    %40 = vector.extract_strided_slice %10 {offsets = [0, 4], sizes = [4, 1], strides = [1, 1]} : vector<4x36xf32> to vector<4x1xf32>
    %41 = vector.extract_strided_slice %39 {offsets = [0, 0], sizes = [1, 512], strides = [1, 1]} : vector<4x512xf32> to vector<1x512xf32>
    %42 = vector.broadcast %40 : vector<4x1xf32> to vector<4x512xf32>
    %43 = vector.broadcast %41 : vector<1x512xf32> to vector<4x512xf32>
    %44 = arith.mulf %42, %43 : vector<4x512xf32>
    %45 = arith.addf %21, %44 : vector<4x512xf32>
    %46 = vector.extract_strided_slice %10 {offsets = [0, 5], sizes = [4, 1], strides = [1, 1]} : vector<4x36xf32> to vector<4x1xf32>
    %47 = vector.extract_strided_slice %39 {offsets = [1, 0], sizes = [1, 512], strides = [1, 1]} : vector<4x512xf32> to vector<1x512xf32>
    %48 = vector.broadcast %46 : vector<4x1xf32> to vector<4x512xf32>
    %49 = vector.broadcast %47 : vector<1x512xf32> to vector<4x512xf32>
    %50 = arith.mulf %48, %49 : vector<4x512xf32>
    %51 = arith.addf %26, %50 : vector<4x512xf32>
    %52 = vector.extract_strided_slice %10 {offsets = [0, 6], sizes = [4, 1], strides = [1, 1]} : vector<4x36xf32> to vector<4x1xf32>
    %53 = vector.extract_strided_slice %39 {offsets = [2, 0], sizes = [1, 512], strides = [1, 1]} : vector<4x512xf32> to vector<1x512xf32>
    %54 = vector.broadcast %52 : vector<4x1xf32> to vector<4x512xf32>
    %55 = vector.broadcast %53 : vector<1x512xf32> to vector<4x512xf32>
    %56 = arith.mulf %54, %55 : vector<4x512xf32>
    %57 = arith.addf %31, %56 : vector<4x512xf32>
    %58 = vector.extract_strided_slice %10 {offsets = [0, 7], sizes = [4, 1], strides = [1, 1]} : vector<4x36xf32> to vector<4x1xf32>
    %59 = vector.extract_strided_slice %39 {offsets = [3, 0], sizes = [1, 512], strides = [1, 1]} : vector<4x512xf32> to vector<1x512xf32>
    %60 = vector.broadcast %58 : vector<4x1xf32> to vector<4x512xf32>
    %61 = vector.broadcast %59 : vector<1x512xf32> to vector<4x512xf32>
    %62 = arith.mulf %60, %61 : vector<4x512xf32>
    %63 = arith.addf %36, %62 : vector<4x512xf32>
    %c15_i32 = arith.constant 15 : i32
    %64 = tpu.dynamic_rotate %9 by %c15_i32 dim 1 : vector<4x512xf32>, i32 -> vector<4x512xf32>
    %65 = vector.broadcast %3 : vector<1x512xf32> to vector<4x512xf32>
    %66 = arith.mulf %64, %65 : vector<4x512xf32>
    %67 = vector.extract_strided_slice %10 {offsets = [0, 8], sizes = [4, 1], strides = [1, 1]} : vector<4x36xf32> to vector<4x1xf32>
    %68 = vector.extract_strided_slice %66 {offsets = [0, 0], sizes = [1, 512], strides = [1, 1]} : vector<4x512xf32> to vector<1x512xf32>
    %69 = vector.broadcast %67 : vector<4x1xf32> to vector<4x512xf32>
    %70 = vector.broadcast %68 : vector<1x512xf32> to vector<4x512xf32>
    %71 = arith.mulf %69, %70 : vector<4x512xf32>
    %72 = arith.addf %45, %71 : vector<4x512xf32>
    %73 = vector.extract_strided_slice %10 {offsets = [0, 9], sizes = [4, 1], strides = [1, 1]} : vector<4x36xf32> to vector<4x1xf32>
    %74 = vector.extract_strided_slice %66 {offsets = [1, 0], sizes = [1, 512], strides = [1, 1]} : vector<4x512xf32> to vector<1x512xf32>
    %75 = vector.broadcast %73 : vector<4x1xf32> to vector<4x512xf32>
    %76 = vector.broadcast %74 : vector<1x512xf32> to vector<4x512xf32>
    %77 = arith.mulf %75, %76 : vector<4x512xf32>
    %78 = arith.addf %51, %77 : vector<4x512xf32>
    %79 = vector.extract_strided_slice %10 {offsets = [0, 10], sizes = [4, 1], strides = [1, 1]} : vector<4x36xf32> to vector<4x1xf32>
    %80 = vector.extract_strided_slice %66 {offsets = [2, 0], sizes = [1, 512], strides = [1, 1]} : vector<4x512xf32> to vector<1x512xf32>
    %81 = vector.broadcast %79 : vector<4x1xf32> to vector<4x512xf32>
    %82 = vector.broadcast %80 : vector<1x512xf32> to vector<4x512xf32>
    %83 = arith.mulf %81, %82 : vector<4x512xf32>
    %84 = arith.addf %57, %83 : vector<4x512xf32>
    %85 = vector.extract_strided_slice %10 {offsets = [0, 11], sizes = [4, 1], strides = [1, 1]} : vector<4x36xf32> to vector<4x1xf32>
    %86 = vector.extract_strided_slice %66 {offsets = [3, 0], sizes = [1, 512], strides = [1, 1]} : vector<4x512xf32> to vector<1x512xf32>
    %87 = vector.broadcast %85 : vector<4x1xf32> to vector<4x512xf32>
    %88 = vector.broadcast %86 : vector<1x512xf32> to vector<4x512xf32>
    %89 = arith.mulf %87, %88 : vector<4x512xf32>
    %90 = arith.addf %63, %89 : vector<4x512xf32>
    %c1_i32 = arith.constant 1 : i32
    %91 = tpu.dynamic_rotate %9 by %c1_i32 dim 1 : vector<4x512xf32>, i32 -> vector<4x512xf32>
    %92 = vector.broadcast %4 : vector<1x512xf32> to vector<4x512xf32>
    %93 = arith.mulf %91, %92 : vector<4x512xf32>
    %94 = vector.extract_strided_slice %10 {offsets = [0, 12], sizes = [4, 1], strides = [1, 1]} : vector<4x36xf32> to vector<4x1xf32>
    %95 = vector.extract_strided_slice %93 {offsets = [0, 0], sizes = [1, 512], strides = [1, 1]} : vector<4x512xf32> to vector<1x512xf32>
    %96 = vector.broadcast %94 : vector<4x1xf32> to vector<4x512xf32>
    %97 = vector.broadcast %95 : vector<1x512xf32> to vector<4x512xf32>
    %98 = arith.mulf %96, %97 : vector<4x512xf32>
    %99 = arith.addf %72, %98 : vector<4x512xf32>
    %100 = vector.extract_strided_slice %10 {offsets = [0, 13], sizes = [4, 1], strides = [1, 1]} : vector<4x36xf32> to vector<4x1xf32>
    %101 = vector.extract_strided_slice %93 {offsets = [1, 0], sizes = [1, 512], strides = [1, 1]} : vector<4x512xf32> to vector<1x512xf32>
    %102 = vector.broadcast %100 : vector<4x1xf32> to vector<4x512xf32>
    %103 = vector.broadcast %101 : vector<1x512xf32> to vector<4x512xf32>
    %104 = arith.mulf %102, %103 : vector<4x512xf32>
    %105 = arith.addf %78, %104 : vector<4x512xf32>
    %106 = vector.extract_strided_slice %10 {offsets = [0, 14], sizes = [4, 1], strides = [1, 1]} : vector<4x36xf32> to vector<4x1xf32>
    %107 = vector.extract_strided_slice %93 {offsets = [2, 0], sizes = [1, 512], strides = [1, 1]} : vector<4x512xf32> to vector<1x512xf32>
    %108 = vector.broadcast %106 : vector<4x1xf32> to vector<4x512xf32>
    %109 = vector.broadcast %107 : vector<1x512xf32> to vector<4x512xf32>
    %110 = arith.mulf %108, %109 : vector<4x512xf32>
    %111 = arith.addf %84, %110 : vector<4x512xf32>
    %112 = vector.extract_strided_slice %10 {offsets = [0, 15], sizes = [4, 1], strides = [1, 1]} : vector<4x36xf32> to vector<4x1xf32>
    %113 = vector.extract_strided_slice %93 {offsets = [3, 0], sizes = [1, 512], strides = [1, 1]} : vector<4x512xf32> to vector<1x512xf32>
    %114 = vector.broadcast %112 : vector<4x1xf32> to vector<4x512xf32>
    %115 = vector.broadcast %113 : vector<1x512xf32> to vector<4x512xf32>
    %116 = arith.mulf %114, %115 : vector<4x512xf32>
    %117 = arith.addf %90, %116 : vector<4x512xf32>
    %118 = vector.extract_strided_slice %10 {offsets = [0, 16], sizes = [4, 1], strides = [1, 1]} : vector<4x36xf32> to vector<4x1xf32>
    %119 = vector.extract_strided_slice %9 {offsets = [0, 0], sizes = [1, 512], strides = [1, 1]} : vector<4x512xf32> to vector<1x512xf32>
    %120 = vector.broadcast %118 : vector<4x1xf32> to vector<4x512xf32>
    %121 = vector.broadcast %119 : vector<1x512xf32> to vector<4x512xf32>
    %122 = arith.mulf %120, %121 : vector<4x512xf32>
    %123 = arith.addf %99, %122 : vector<4x512xf32>
    %124 = vector.extract_strided_slice %10 {offsets = [0, 17], sizes = [4, 1], strides = [1, 1]} : vector<4x36xf32> to vector<4x1xf32>
    %125 = vector.extract_strided_slice %9 {offsets = [1, 0], sizes = [1, 512], strides = [1, 1]} : vector<4x512xf32> to vector<1x512xf32>
    %126 = vector.broadcast %124 : vector<4x1xf32> to vector<4x512xf32>
    %127 = vector.broadcast %125 : vector<1x512xf32> to vector<4x512xf32>
    %128 = arith.mulf %126, %127 : vector<4x512xf32>
    %129 = arith.addf %105, %128 : vector<4x512xf32>
    %130 = vector.extract_strided_slice %10 {offsets = [0, 18], sizes = [4, 1], strides = [1, 1]} : vector<4x36xf32> to vector<4x1xf32>
    %131 = vector.extract_strided_slice %9 {offsets = [2, 0], sizes = [1, 512], strides = [1, 1]} : vector<4x512xf32> to vector<1x512xf32>
    %132 = vector.broadcast %130 : vector<4x1xf32> to vector<4x512xf32>
    %133 = vector.broadcast %131 : vector<1x512xf32> to vector<4x512xf32>
    %134 = arith.mulf %132, %133 : vector<4x512xf32>
    %135 = arith.addf %111, %134 : vector<4x512xf32>
    %136 = vector.extract_strided_slice %10 {offsets = [0, 19], sizes = [4, 1], strides = [1, 1]} : vector<4x36xf32> to vector<4x1xf32>
    %137 = vector.extract_strided_slice %9 {offsets = [3, 0], sizes = [1, 512], strides = [1, 1]} : vector<4x512xf32> to vector<1x512xf32>
    %138 = vector.broadcast %136 : vector<4x1xf32> to vector<4x512xf32>
    %139 = vector.broadcast %137 : vector<1x512xf32> to vector<4x512xf32>
    %140 = arith.mulf %138, %139 : vector<4x512xf32>
    %141 = arith.addf %117, %140 : vector<4x512xf32>
    %c511_i32 = arith.constant 511 : i32
    %142 = tpu.dynamic_rotate %9 by %c511_i32 dim 1 : vector<4x512xf32>, i32 -> vector<4x512xf32>
    %143 = vector.broadcast %5 : vector<1x512xf32> to vector<4x512xf32>
    %144 = arith.mulf %142, %143 : vector<4x512xf32>
    %145 = vector.extract_strided_slice %10 {offsets = [0, 20], sizes = [4, 1], strides = [1, 1]} : vector<4x36xf32> to vector<4x1xf32>
    %146 = vector.extract_strided_slice %144 {offsets = [0, 0], sizes = [1, 512], strides = [1, 1]} : vector<4x512xf32> to vector<1x512xf32>
    %147 = vector.broadcast %145 : vector<4x1xf32> to vector<4x512xf32>
    %148 = vector.broadcast %146 : vector<1x512xf32> to vector<4x512xf32>
    %149 = arith.mulf %147, %148 : vector<4x512xf32>
    %150 = arith.addf %123, %149 : vector<4x512xf32>
    %151 = vector.extract_strided_slice %10 {offsets = [0, 21], sizes = [4, 1], strides = [1, 1]} : vector<4x36xf32> to vector<4x1xf32>
    %152 = vector.extract_strided_slice %144 {offsets = [1, 0], sizes = [1, 512], strides = [1, 1]} : vector<4x512xf32> to vector<1x512xf32>
    %153 = vector.broadcast %151 : vector<4x1xf32> to vector<4x512xf32>
    %154 = vector.broadcast %152 : vector<1x512xf32> to vector<4x512xf32>
    %155 = arith.mulf %153, %154 : vector<4x512xf32>
    %156 = arith.addf %129, %155 : vector<4x512xf32>
    %157 = vector.extract_strided_slice %10 {offsets = [0, 22], sizes = [4, 1], strides = [1, 1]} : vector<4x36xf32> to vector<4x1xf32>
    %158 = vector.extract_strided_slice %144 {offsets = [2, 0], sizes = [1, 512], strides = [1, 1]} : vector<4x512xf32> to vector<1x512xf32>
    %159 = vector.broadcast %157 : vector<4x1xf32> to vector<4x512xf32>
    %160 = vector.broadcast %158 : vector<1x512xf32> to vector<4x512xf32>
    %161 = arith.mulf %159, %160 : vector<4x512xf32>
    %162 = arith.addf %135, %161 : vector<4x512xf32>
    %163 = vector.extract_strided_slice %10 {offsets = [0, 23], sizes = [4, 1], strides = [1, 1]} : vector<4x36xf32> to vector<4x1xf32>
    %164 = vector.extract_strided_slice %144 {offsets = [3, 0], sizes = [1, 512], strides = [1, 1]} : vector<4x512xf32> to vector<1x512xf32>
    %165 = vector.broadcast %163 : vector<4x1xf32> to vector<4x512xf32>
    %166 = vector.broadcast %164 : vector<1x512xf32> to vector<4x512xf32>
    %167 = arith.mulf %165, %166 : vector<4x512xf32>
    %168 = arith.addf %141, %167 : vector<4x512xf32>
    %c497_i32 = arith.constant 497 : i32
    %169 = tpu.dynamic_rotate %9 by %c497_i32 dim 1 : vector<4x512xf32>, i32 -> vector<4x512xf32>
    %170 = vector.broadcast %6 : vector<1x512xf32> to vector<4x512xf32>
    %171 = arith.mulf %169, %170 : vector<4x512xf32>
    %172 = vector.extract_strided_slice %10 {offsets = [0, 24], sizes = [4, 1], strides = [1, 1]} : vector<4x36xf32> to vector<4x1xf32>
    %173 = vector.extract_strided_slice %171 {offsets = [0, 0], sizes = [1, 512], strides = [1, 1]} : vector<4x512xf32> to vector<1x512xf32>
    %174 = vector.broadcast %172 : vector<4x1xf32> to vector<4x512xf32>
    %175 = vector.broadcast %173 : vector<1x512xf32> to vector<4x512xf32>
    %176 = arith.mulf %174, %175 : vector<4x512xf32>
    %177 = arith.addf %150, %176 : vector<4x512xf32>
    %178 = vector.extract_strided_slice %10 {offsets = [0, 25], sizes = [4, 1], strides = [1, 1]} : vector<4x36xf32> to vector<4x1xf32>
    %179 = vector.extract_strided_slice %171 {offsets = [1, 0], sizes = [1, 512], strides = [1, 1]} : vector<4x512xf32> to vector<1x512xf32>
    %180 = vector.broadcast %178 : vector<4x1xf32> to vector<4x512xf32>
    %181 = vector.broadcast %179 : vector<1x512xf32> to vector<4x512xf32>
    %182 = arith.mulf %180, %181 : vector<4x512xf32>
    %183 = arith.addf %156, %182 : vector<4x512xf32>
    %184 = vector.extract_strided_slice %10 {offsets = [0, 26], sizes = [4, 1], strides = [1, 1]} : vector<4x36xf32> to vector<4x1xf32>
    %185 = vector.extract_strided_slice %171 {offsets = [2, 0], sizes = [1, 512], strides = [1, 1]} : vector<4x512xf32> to vector<1x512xf32>
    %186 = vector.broadcast %184 : vector<4x1xf32> to vector<4x512xf32>
    %187 = vector.broadcast %185 : vector<1x512xf32> to vector<4x512xf32>
    %188 = arith.mulf %186, %187 : vector<4x512xf32>
    %189 = arith.addf %162, %188 : vector<4x512xf32>
    %190 = vector.extract_strided_slice %10 {offsets = [0, 27], sizes = [4, 1], strides = [1, 1]} : vector<4x36xf32> to vector<4x1xf32>
    %191 = vector.extract_strided_slice %171 {offsets = [3, 0], sizes = [1, 512], strides = [1, 1]} : vector<4x512xf32> to vector<1x512xf32>
    %192 = vector.broadcast %190 : vector<4x1xf32> to vector<4x512xf32>
    %193 = vector.broadcast %191 : vector<1x512xf32> to vector<4x512xf32>
    %194 = arith.mulf %192, %193 : vector<4x512xf32>
    %195 = arith.addf %168, %194 : vector<4x512xf32>
    %c496_i32 = arith.constant 496 : i32
    %196 = tpu.dynamic_rotate %9 by %c496_i32 dim 1 : vector<4x512xf32>, i32 -> vector<4x512xf32>
    %197 = vector.broadcast %7 : vector<1x512xf32> to vector<4x512xf32>
    %198 = arith.mulf %196, %197 : vector<4x512xf32>
    %199 = vector.extract_strided_slice %10 {offsets = [0, 28], sizes = [4, 1], strides = [1, 1]} : vector<4x36xf32> to vector<4x1xf32>
    %200 = vector.extract_strided_slice %198 {offsets = [0, 0], sizes = [1, 512], strides = [1, 1]} : vector<4x512xf32> to vector<1x512xf32>
    %201 = vector.broadcast %199 : vector<4x1xf32> to vector<4x512xf32>
    %202 = vector.broadcast %200 : vector<1x512xf32> to vector<4x512xf32>
    %203 = arith.mulf %201, %202 : vector<4x512xf32>
    %204 = arith.addf %177, %203 : vector<4x512xf32>
    %205 = vector.extract_strided_slice %10 {offsets = [0, 29], sizes = [4, 1], strides = [1, 1]} : vector<4x36xf32> to vector<4x1xf32>
    %206 = vector.extract_strided_slice %198 {offsets = [1, 0], sizes = [1, 512], strides = [1, 1]} : vector<4x512xf32> to vector<1x512xf32>
    %207 = vector.broadcast %205 : vector<4x1xf32> to vector<4x512xf32>
    %208 = vector.broadcast %206 : vector<1x512xf32> to vector<4x512xf32>
    %209 = arith.mulf %207, %208 : vector<4x512xf32>
    %210 = arith.addf %183, %209 : vector<4x512xf32>
    %211 = vector.extract_strided_slice %10 {offsets = [0, 30], sizes = [4, 1], strides = [1, 1]} : vector<4x36xf32> to vector<4x1xf32>
    %212 = vector.extract_strided_slice %198 {offsets = [2, 0], sizes = [1, 512], strides = [1, 1]} : vector<4x512xf32> to vector<1x512xf32>
    %213 = vector.broadcast %211 : vector<4x1xf32> to vector<4x512xf32>
    %214 = vector.broadcast %212 : vector<1x512xf32> to vector<4x512xf32>
    %215 = arith.mulf %213, %214 : vector<4x512xf32>
    %216 = arith.addf %189, %215 : vector<4x512xf32>
    %217 = vector.extract_strided_slice %10 {offsets = [0, 31], sizes = [4, 1], strides = [1, 1]} : vector<4x36xf32> to vector<4x1xf32>
    %218 = vector.extract_strided_slice %198 {offsets = [3, 0], sizes = [1, 512], strides = [1, 1]} : vector<4x512xf32> to vector<1x512xf32>
    %219 = vector.broadcast %217 : vector<4x1xf32> to vector<4x512xf32>
    %220 = vector.broadcast %218 : vector<1x512xf32> to vector<4x512xf32>
    %221 = arith.mulf %219, %220 : vector<4x512xf32>
    %222 = arith.addf %195, %221 : vector<4x512xf32>
    %c495_i32 = arith.constant 495 : i32
    %223 = tpu.dynamic_rotate %9 by %c495_i32 dim 1 : vector<4x512xf32>, i32 -> vector<4x512xf32>
    %224 = vector.broadcast %8 : vector<1x512xf32> to vector<4x512xf32>
    %225 = arith.mulf %223, %224 : vector<4x512xf32>
    %226 = vector.extract_strided_slice %10 {offsets = [0, 32], sizes = [4, 1], strides = [1, 1]} : vector<4x36xf32> to vector<4x1xf32>
    %227 = vector.extract_strided_slice %225 {offsets = [0, 0], sizes = [1, 512], strides = [1, 1]} : vector<4x512xf32> to vector<1x512xf32>
    %228 = vector.broadcast %226 : vector<4x1xf32> to vector<4x512xf32>
    %229 = vector.broadcast %227 : vector<1x512xf32> to vector<4x512xf32>
    %230 = arith.mulf %228, %229 : vector<4x512xf32>
    %231 = arith.addf %204, %230 : vector<4x512xf32>
    %232 = vector.extract_strided_slice %10 {offsets = [0, 33], sizes = [4, 1], strides = [1, 1]} : vector<4x36xf32> to vector<4x1xf32>
    %233 = vector.extract_strided_slice %225 {offsets = [1, 0], sizes = [1, 512], strides = [1, 1]} : vector<4x512xf32> to vector<1x512xf32>
    %234 = vector.broadcast %232 : vector<4x1xf32> to vector<4x512xf32>
    %235 = vector.broadcast %233 : vector<1x512xf32> to vector<4x512xf32>
    %236 = arith.mulf %234, %235 : vector<4x512xf32>
    %237 = arith.addf %210, %236 : vector<4x512xf32>
    %238 = vector.extract_strided_slice %10 {offsets = [0, 34], sizes = [4, 1], strides = [1, 1]} : vector<4x36xf32> to vector<4x1xf32>
    %239 = vector.extract_strided_slice %225 {offsets = [2, 0], sizes = [1, 512], strides = [1, 1]} : vector<4x512xf32> to vector<1x512xf32>
    %240 = vector.broadcast %238 : vector<4x1xf32> to vector<4x512xf32>
    %241 = vector.broadcast %239 : vector<1x512xf32> to vector<4x512xf32>
    %242 = arith.mulf %240, %241 : vector<4x512xf32>
    %243 = arith.addf %216, %242 : vector<4x512xf32>
    %244 = vector.extract_strided_slice %10 {offsets = [0, 35], sizes = [4, 1], strides = [1, 1]} : vector<4x36xf32> to vector<4x1xf32>
    %245 = vector.extract_strided_slice %225 {offsets = [3, 0], sizes = [1, 512], strides = [1, 1]} : vector<4x512xf32> to vector<1x512xf32>
    %246 = vector.broadcast %244 : vector<4x1xf32> to vector<4x512xf32>
    %247 = vector.broadcast %245 : vector<1x512xf32> to vector<4x512xf32>
    %248 = arith.mulf %246, %247 : vector<4x512xf32>
    %249 = arith.addf %222, %248 : vector<4x512xf32>
    %250 = arith.addf %231, %237 : vector<4x512xf32>
    %251 = arith.addf %243, %249 : vector<4x512xf32>
    %252 = arith.addf %250, %251 : vector<4x512xf32>
    %253 = vector.broadcast %11 : vector<4x1xf32> to vector<4x512xf32>
    %254 = arith.addf %252, %253 : vector<4x512xf32>
    %cst = arith.constant 0.000000e+00 : f32
    %255 = vector.broadcast %cst : f32 to vector<4x512xf32>
    %256 = arith.maximumf %254, %255 : vector<4x512xf32>
    %c17_i32_11 = arith.constant 17 : i32
    %257 = tpu.dynamic_rotate %256 by %c17_i32_11 dim 1 : vector<4x512xf32>, i32 -> vector<4x512xf32>
    %258 = vector.broadcast %1 : vector<1x512xf32> to vector<4x512xf32>
    %259 = arith.mulf %257, %258 : vector<4x512xf32>
    %260 = vector.extract_strided_slice %12 {offsets = [0, 0], sizes = [4, 1], strides = [1, 1]} : vector<4x36xf32> to vector<4x1xf32>
    %261 = vector.extract_strided_slice %259 {offsets = [0, 0], sizes = [1, 512], strides = [1, 1]} : vector<4x512xf32> to vector<1x512xf32>
    %262 = vector.broadcast %260 : vector<4x1xf32> to vector<4x512xf32>
    %263 = vector.broadcast %261 : vector<1x512xf32> to vector<4x512xf32>
    %264 = arith.mulf %262, %263 : vector<4x512xf32>
    %265 = vector.extract_strided_slice %12 {offsets = [0, 1], sizes = [4, 1], strides = [1, 1]} : vector<4x36xf32> to vector<4x1xf32>
    %266 = vector.extract_strided_slice %259 {offsets = [1, 0], sizes = [1, 512], strides = [1, 1]} : vector<4x512xf32> to vector<1x512xf32>
    %267 = vector.broadcast %265 : vector<4x1xf32> to vector<4x512xf32>
    %268 = vector.broadcast %266 : vector<1x512xf32> to vector<4x512xf32>
    %269 = arith.mulf %267, %268 : vector<4x512xf32>
    %270 = vector.extract_strided_slice %12 {offsets = [0, 2], sizes = [4, 1], strides = [1, 1]} : vector<4x36xf32> to vector<4x1xf32>
    %271 = vector.extract_strided_slice %259 {offsets = [2, 0], sizes = [1, 512], strides = [1, 1]} : vector<4x512xf32> to vector<1x512xf32>
    %272 = vector.broadcast %270 : vector<4x1xf32> to vector<4x512xf32>
    %273 = vector.broadcast %271 : vector<1x512xf32> to vector<4x512xf32>
    %274 = arith.mulf %272, %273 : vector<4x512xf32>
    %275 = vector.extract_strided_slice %12 {offsets = [0, 3], sizes = [4, 1], strides = [1, 1]} : vector<4x36xf32> to vector<4x1xf32>
    %276 = vector.extract_strided_slice %259 {offsets = [3, 0], sizes = [1, 512], strides = [1, 1]} : vector<4x512xf32> to vector<1x512xf32>
    %277 = vector.broadcast %275 : vector<4x1xf32> to vector<4x512xf32>
    %278 = vector.broadcast %276 : vector<1x512xf32> to vector<4x512xf32>
    %279 = arith.mulf %277, %278 : vector<4x512xf32>
    %c16_i32_12 = arith.constant 16 : i32
    %280 = tpu.dynamic_rotate %256 by %c16_i32_12 dim 1 : vector<4x512xf32>, i32 -> vector<4x512xf32>
    %281 = vector.broadcast %2 : vector<1x512xf32> to vector<4x512xf32>
    %282 = arith.mulf %280, %281 : vector<4x512xf32>
    %283 = vector.extract_strided_slice %12 {offsets = [0, 4], sizes = [4, 1], strides = [1, 1]} : vector<4x36xf32> to vector<4x1xf32>
    %284 = vector.extract_strided_slice %282 {offsets = [0, 0], sizes = [1, 512], strides = [1, 1]} : vector<4x512xf32> to vector<1x512xf32>
    %285 = vector.broadcast %283 : vector<4x1xf32> to vector<4x512xf32>
    %286 = vector.broadcast %284 : vector<1x512xf32> to vector<4x512xf32>
    %287 = arith.mulf %285, %286 : vector<4x512xf32>
    %288 = arith.addf %264, %287 : vector<4x512xf32>
    %289 = vector.extract_strided_slice %12 {offsets = [0, 5], sizes = [4, 1], strides = [1, 1]} : vector<4x36xf32> to vector<4x1xf32>
    %290 = vector.extract_strided_slice %282 {offsets = [1, 0], sizes = [1, 512], strides = [1, 1]} : vector<4x512xf32> to vector<1x512xf32>
    %291 = vector.broadcast %289 : vector<4x1xf32> to vector<4x512xf32>
    %292 = vector.broadcast %290 : vector<1x512xf32> to vector<4x512xf32>
    %293 = arith.mulf %291, %292 : vector<4x512xf32>
    %294 = arith.addf %269, %293 : vector<4x512xf32>
    %295 = vector.extract_strided_slice %12 {offsets = [0, 6], sizes = [4, 1], strides = [1, 1]} : vector<4x36xf32> to vector<4x1xf32>
    %296 = vector.extract_strided_slice %282 {offsets = [2, 0], sizes = [1, 512], strides = [1, 1]} : vector<4x512xf32> to vector<1x512xf32>
    %297 = vector.broadcast %295 : vector<4x1xf32> to vector<4x512xf32>
    %298 = vector.broadcast %296 : vector<1x512xf32> to vector<4x512xf32>
    %299 = arith.mulf %297, %298 : vector<4x512xf32>
    %300 = arith.addf %274, %299 : vector<4x512xf32>
    %301 = vector.extract_strided_slice %12 {offsets = [0, 7], sizes = [4, 1], strides = [1, 1]} : vector<4x36xf32> to vector<4x1xf32>
    %302 = vector.extract_strided_slice %282 {offsets = [3, 0], sizes = [1, 512], strides = [1, 1]} : vector<4x512xf32> to vector<1x512xf32>
    %303 = vector.broadcast %301 : vector<4x1xf32> to vector<4x512xf32>
    %304 = vector.broadcast %302 : vector<1x512xf32> to vector<4x512xf32>
    %305 = arith.mulf %303, %304 : vector<4x512xf32>
    %306 = arith.addf %279, %305 : vector<4x512xf32>
    %c15_i32_13 = arith.constant 15 : i32
    %307 = tpu.dynamic_rotate %256 by %c15_i32_13 dim 1 : vector<4x512xf32>, i32 -> vector<4x512xf32>
    %308 = vector.broadcast %3 : vector<1x512xf32> to vector<4x512xf32>
    %309 = arith.mulf %307, %308 : vector<4x512xf32>
    %310 = vector.extract_strided_slice %12 {offsets = [0, 8], sizes = [4, 1], strides = [1, 1]} : vector<4x36xf32> to vector<4x1xf32>
    %311 = vector.extract_strided_slice %309 {offsets = [0, 0], sizes = [1, 512], strides = [1, 1]} : vector<4x512xf32> to vector<1x512xf32>
    %312 = vector.broadcast %310 : vector<4x1xf32> to vector<4x512xf32>
    %313 = vector.broadcast %311 : vector<1x512xf32> to vector<4x512xf32>
    %314 = arith.mulf %312, %313 : vector<4x512xf32>
    %315 = arith.addf %288, %314 : vector<4x512xf32>
    %316 = vector.extract_strided_slice %12 {offsets = [0, 9], sizes = [4, 1], strides = [1, 1]} : vector<4x36xf32> to vector<4x1xf32>
    %317 = vector.extract_strided_slice %309 {offsets = [1, 0], sizes = [1, 512], strides = [1, 1]} : vector<4x512xf32> to vector<1x512xf32>
    %318 = vector.broadcast %316 : vector<4x1xf32> to vector<4x512xf32>
    %319 = vector.broadcast %317 : vector<1x512xf32> to vector<4x512xf32>
    %320 = arith.mulf %318, %319 : vector<4x512xf32>
    %321 = arith.addf %294, %320 : vector<4x512xf32>
    %322 = vector.extract_strided_slice %12 {offsets = [0, 10], sizes = [4, 1], strides = [1, 1]} : vector<4x36xf32> to vector<4x1xf32>
    %323 = vector.extract_strided_slice %309 {offsets = [2, 0], sizes = [1, 512], strides = [1, 1]} : vector<4x512xf32> to vector<1x512xf32>
    %324 = vector.broadcast %322 : vector<4x1xf32> to vector<4x512xf32>
    %325 = vector.broadcast %323 : vector<1x512xf32> to vector<4x512xf32>
    %326 = arith.mulf %324, %325 : vector<4x512xf32>
    %327 = arith.addf %300, %326 : vector<4x512xf32>
    %328 = vector.extract_strided_slice %12 {offsets = [0, 11], sizes = [4, 1], strides = [1, 1]} : vector<4x36xf32> to vector<4x1xf32>
    %329 = vector.extract_strided_slice %309 {offsets = [3, 0], sizes = [1, 512], strides = [1, 1]} : vector<4x512xf32> to vector<1x512xf32>
    %330 = vector.broadcast %328 : vector<4x1xf32> to vector<4x512xf32>
    %331 = vector.broadcast %329 : vector<1x512xf32> to vector<4x512xf32>
    %332 = arith.mulf %330, %331 : vector<4x512xf32>
    %333 = arith.addf %306, %332 : vector<4x512xf32>
    %c1_i32_14 = arith.constant 1 : i32
    %334 = tpu.dynamic_rotate %256 by %c1_i32_14 dim 1 : vector<4x512xf32>, i32 -> vector<4x512xf32>
    %335 = vector.broadcast %4 : vector<1x512xf32> to vector<4x512xf32>
    %336 = arith.mulf %334, %335 : vector<4x512xf32>
    %337 = vector.extract_strided_slice %12 {offsets = [0, 12], sizes = [4, 1], strides = [1, 1]} : vector<4x36xf32> to vector<4x1xf32>
    %338 = vector.extract_strided_slice %336 {offsets = [0, 0], sizes = [1, 512], strides = [1, 1]} : vector<4x512xf32> to vector<1x512xf32>
    %339 = vector.broadcast %337 : vector<4x1xf32> to vector<4x512xf32>
    %340 = vector.broadcast %338 : vector<1x512xf32> to vector<4x512xf32>
    %341 = arith.mulf %339, %340 : vector<4x512xf32>
    %342 = arith.addf %315, %341 : vector<4x512xf32>
    %343 = vector.extract_strided_slice %12 {offsets = [0, 13], sizes = [4, 1], strides = [1, 1]} : vector<4x36xf32> to vector<4x1xf32>
    %344 = vector.extract_strided_slice %336 {offsets = [1, 0], sizes = [1, 512], strides = [1, 1]} : vector<4x512xf32> to vector<1x512xf32>
    %345 = vector.broadcast %343 : vector<4x1xf32> to vector<4x512xf32>
    %346 = vector.broadcast %344 : vector<1x512xf32> to vector<4x512xf32>
    %347 = arith.mulf %345, %346 : vector<4x512xf32>
    %348 = arith.addf %321, %347 : vector<4x512xf32>
    %349 = vector.extract_strided_slice %12 {offsets = [0, 14], sizes = [4, 1], strides = [1, 1]} : vector<4x36xf32> to vector<4x1xf32>
    %350 = vector.extract_strided_slice %336 {offsets = [2, 0], sizes = [1, 512], strides = [1, 1]} : vector<4x512xf32> to vector<1x512xf32>
    %351 = vector.broadcast %349 : vector<4x1xf32> to vector<4x512xf32>
    %352 = vector.broadcast %350 : vector<1x512xf32> to vector<4x512xf32>
    %353 = arith.mulf %351, %352 : vector<4x512xf32>
    %354 = arith.addf %327, %353 : vector<4x512xf32>
    %355 = vector.extract_strided_slice %12 {offsets = [0, 15], sizes = [4, 1], strides = [1, 1]} : vector<4x36xf32> to vector<4x1xf32>
    %356 = vector.extract_strided_slice %336 {offsets = [3, 0], sizes = [1, 512], strides = [1, 1]} : vector<4x512xf32> to vector<1x512xf32>
    %357 = vector.broadcast %355 : vector<4x1xf32> to vector<4x512xf32>
    %358 = vector.broadcast %356 : vector<1x512xf32> to vector<4x512xf32>
    %359 = arith.mulf %357, %358 : vector<4x512xf32>
    %360 = arith.addf %333, %359 : vector<4x512xf32>
    %361 = vector.extract_strided_slice %12 {offsets = [0, 16], sizes = [4, 1], strides = [1, 1]} : vector<4x36xf32> to vector<4x1xf32>
    %362 = vector.extract_strided_slice %256 {offsets = [0, 0], sizes = [1, 512], strides = [1, 1]} : vector<4x512xf32> to vector<1x512xf32>
    %363 = vector.broadcast %361 : vector<4x1xf32> to vector<4x512xf32>
    %364 = vector.broadcast %362 : vector<1x512xf32> to vector<4x512xf32>
    %365 = arith.mulf %363, %364 : vector<4x512xf32>
    %366 = arith.addf %342, %365 : vector<4x512xf32>
    %367 = vector.extract_strided_slice %12 {offsets = [0, 17], sizes = [4, 1], strides = [1, 1]} : vector<4x36xf32> to vector<4x1xf32>
    %368 = vector.extract_strided_slice %256 {offsets = [1, 0], sizes = [1, 512], strides = [1, 1]} : vector<4x512xf32> to vector<1x512xf32>
    %369 = vector.broadcast %367 : vector<4x1xf32> to vector<4x512xf32>
    %370 = vector.broadcast %368 : vector<1x512xf32> to vector<4x512xf32>
    %371 = arith.mulf %369, %370 : vector<4x512xf32>
    %372 = arith.addf %348, %371 : vector<4x512xf32>
    %373 = vector.extract_strided_slice %12 {offsets = [0, 18], sizes = [4, 1], strides = [1, 1]} : vector<4x36xf32> to vector<4x1xf32>
    %374 = vector.extract_strided_slice %256 {offsets = [2, 0], sizes = [1, 512], strides = [1, 1]} : vector<4x512xf32> to vector<1x512xf32>
    %375 = vector.broadcast %373 : vector<4x1xf32> to vector<4x512xf32>
    %376 = vector.broadcast %374 : vector<1x512xf32> to vector<4x512xf32>
    %377 = arith.mulf %375, %376 : vector<4x512xf32>
    %378 = arith.addf %354, %377 : vector<4x512xf32>
    %379 = vector.extract_strided_slice %12 {offsets = [0, 19], sizes = [4, 1], strides = [1, 1]} : vector<4x36xf32> to vector<4x1xf32>
    %380 = vector.extract_strided_slice %256 {offsets = [3, 0], sizes = [1, 512], strides = [1, 1]} : vector<4x512xf32> to vector<1x512xf32>
    %381 = vector.broadcast %379 : vector<4x1xf32> to vector<4x512xf32>
    %382 = vector.broadcast %380 : vector<1x512xf32> to vector<4x512xf32>
    %383 = arith.mulf %381, %382 : vector<4x512xf32>
    %384 = arith.addf %360, %383 : vector<4x512xf32>
    %c511_i32_15 = arith.constant 511 : i32
    %385 = tpu.dynamic_rotate %256 by %c511_i32_15 dim 1 : vector<4x512xf32>, i32 -> vector<4x512xf32>
    %386 = vector.broadcast %5 : vector<1x512xf32> to vector<4x512xf32>
    %387 = arith.mulf %385, %386 : vector<4x512xf32>
    %388 = vector.extract_strided_slice %12 {offsets = [0, 20], sizes = [4, 1], strides = [1, 1]} : vector<4x36xf32> to vector<4x1xf32>
    %389 = vector.extract_strided_slice %387 {offsets = [0, 0], sizes = [1, 512], strides = [1, 1]} : vector<4x512xf32> to vector<1x512xf32>
    %390 = vector.broadcast %388 : vector<4x1xf32> to vector<4x512xf32>
    %391 = vector.broadcast %389 : vector<1x512xf32> to vector<4x512xf32>
    %392 = arith.mulf %390, %391 : vector<4x512xf32>
    %393 = arith.addf %366, %392 : vector<4x512xf32>
    %394 = vector.extract_strided_slice %12 {offsets = [0, 21], sizes = [4, 1], strides = [1, 1]} : vector<4x36xf32> to vector<4x1xf32>
    %395 = vector.extract_strided_slice %387 {offsets = [1, 0], sizes = [1, 512], strides = [1, 1]} : vector<4x512xf32> to vector<1x512xf32>
    %396 = vector.broadcast %394 : vector<4x1xf32> to vector<4x512xf32>
    %397 = vector.broadcast %395 : vector<1x512xf32> to vector<4x512xf32>
    %398 = arith.mulf %396, %397 : vector<4x512xf32>
    %399 = arith.addf %372, %398 : vector<4x512xf32>
    %400 = vector.extract_strided_slice %12 {offsets = [0, 22], sizes = [4, 1], strides = [1, 1]} : vector<4x36xf32> to vector<4x1xf32>
    %401 = vector.extract_strided_slice %387 {offsets = [2, 0], sizes = [1, 512], strides = [1, 1]} : vector<4x512xf32> to vector<1x512xf32>
    %402 = vector.broadcast %400 : vector<4x1xf32> to vector<4x512xf32>
    %403 = vector.broadcast %401 : vector<1x512xf32> to vector<4x512xf32>
    %404 = arith.mulf %402, %403 : vector<4x512xf32>
    %405 = arith.addf %378, %404 : vector<4x512xf32>
    %406 = vector.extract_strided_slice %12 {offsets = [0, 23], sizes = [4, 1], strides = [1, 1]} : vector<4x36xf32> to vector<4x1xf32>
    %407 = vector.extract_strided_slice %387 {offsets = [3, 0], sizes = [1, 512], strides = [1, 1]} : vector<4x512xf32> to vector<1x512xf32>
    %408 = vector.broadcast %406 : vector<4x1xf32> to vector<4x512xf32>
    %409 = vector.broadcast %407 : vector<1x512xf32> to vector<4x512xf32>
    %410 = arith.mulf %408, %409 : vector<4x512xf32>
    %411 = arith.addf %384, %410 : vector<4x512xf32>
    %c497_i32_16 = arith.constant 497 : i32
    %412 = tpu.dynamic_rotate %256 by %c497_i32_16 dim 1 : vector<4x512xf32>, i32 -> vector<4x512xf32>
    %413 = vector.broadcast %6 : vector<1x512xf32> to vector<4x512xf32>
    %414 = arith.mulf %412, %413 : vector<4x512xf32>
    %415 = vector.extract_strided_slice %12 {offsets = [0, 24], sizes = [4, 1], strides = [1, 1]} : vector<4x36xf32> to vector<4x1xf32>
    %416 = vector.extract_strided_slice %414 {offsets = [0, 0], sizes = [1, 512], strides = [1, 1]} : vector<4x512xf32> to vector<1x512xf32>
    %417 = vector.broadcast %415 : vector<4x1xf32> to vector<4x512xf32>
    %418 = vector.broadcast %416 : vector<1x512xf32> to vector<4x512xf32>
    %419 = arith.mulf %417, %418 : vector<4x512xf32>
    %420 = arith.addf %393, %419 : vector<4x512xf32>
    %421 = vector.extract_strided_slice %12 {offsets = [0, 25], sizes = [4, 1], strides = [1, 1]} : vector<4x36xf32> to vector<4x1xf32>
    %422 = vector.extract_strided_slice %414 {offsets = [1, 0], sizes = [1, 512], strides = [1, 1]} : vector<4x512xf32> to vector<1x512xf32>
    %423 = vector.broadcast %421 : vector<4x1xf32> to vector<4x512xf32>
    %424 = vector.broadcast %422 : vector<1x512xf32> to vector<4x512xf32>
    %425 = arith.mulf %423, %424 : vector<4x512xf32>
    %426 = arith.addf %399, %425 : vector<4x512xf32>
    %427 = vector.extract_strided_slice %12 {offsets = [0, 26], sizes = [4, 1], strides = [1, 1]} : vector<4x36xf32> to vector<4x1xf32>
    %428 = vector.extract_strided_slice %414 {offsets = [2, 0], sizes = [1, 512], strides = [1, 1]} : vector<4x512xf32> to vector<1x512xf32>
    %429 = vector.broadcast %427 : vector<4x1xf32> to vector<4x512xf32>
    %430 = vector.broadcast %428 : vector<1x512xf32> to vector<4x512xf32>
    %431 = arith.mulf %429, %430 : vector<4x512xf32>
    %432 = arith.addf %405, %431 : vector<4x512xf32>
    %433 = vector.extract_strided_slice %12 {offsets = [0, 27], sizes = [4, 1], strides = [1, 1]} : vector<4x36xf32> to vector<4x1xf32>
    %434 = vector.extract_strided_slice %414 {offsets = [3, 0], sizes = [1, 512], strides = [1, 1]} : vector<4x512xf32> to vector<1x512xf32>
    %435 = vector.broadcast %433 : vector<4x1xf32> to vector<4x512xf32>
    %436 = vector.broadcast %434 : vector<1x512xf32> to vector<4x512xf32>
    %437 = arith.mulf %435, %436 : vector<4x512xf32>
    %438 = arith.addf %411, %437 : vector<4x512xf32>
    %c496_i32_17 = arith.constant 496 : i32
    %439 = tpu.dynamic_rotate %256 by %c496_i32_17 dim 1 : vector<4x512xf32>, i32 -> vector<4x512xf32>
    %440 = vector.broadcast %7 : vector<1x512xf32> to vector<4x512xf32>
    %441 = arith.mulf %439, %440 : vector<4x512xf32>
    %442 = vector.extract_strided_slice %12 {offsets = [0, 28], sizes = [4, 1], strides = [1, 1]} : vector<4x36xf32> to vector<4x1xf32>
    %443 = vector.extract_strided_slice %441 {offsets = [0, 0], sizes = [1, 512], strides = [1, 1]} : vector<4x512xf32> to vector<1x512xf32>
    %444 = vector.broadcast %442 : vector<4x1xf32> to vector<4x512xf32>
    %445 = vector.broadcast %443 : vector<1x512xf32> to vector<4x512xf32>
    %446 = arith.mulf %444, %445 : vector<4x512xf32>
    %447 = arith.addf %420, %446 : vector<4x512xf32>
    %448 = vector.extract_strided_slice %12 {offsets = [0, 29], sizes = [4, 1], strides = [1, 1]} : vector<4x36xf32> to vector<4x1xf32>
    %449 = vector.extract_strided_slice %441 {offsets = [1, 0], sizes = [1, 512], strides = [1, 1]} : vector<4x512xf32> to vector<1x512xf32>
    %450 = vector.broadcast %448 : vector<4x1xf32> to vector<4x512xf32>
    %451 = vector.broadcast %449 : vector<1x512xf32> to vector<4x512xf32>
    %452 = arith.mulf %450, %451 : vector<4x512xf32>
    %453 = arith.addf %426, %452 : vector<4x512xf32>
    %454 = vector.extract_strided_slice %12 {offsets = [0, 30], sizes = [4, 1], strides = [1, 1]} : vector<4x36xf32> to vector<4x1xf32>
    %455 = vector.extract_strided_slice %441 {offsets = [2, 0], sizes = [1, 512], strides = [1, 1]} : vector<4x512xf32> to vector<1x512xf32>
    %456 = vector.broadcast %454 : vector<4x1xf32> to vector<4x512xf32>
    %457 = vector.broadcast %455 : vector<1x512xf32> to vector<4x512xf32>
    %458 = arith.mulf %456, %457 : vector<4x512xf32>
    %459 = arith.addf %432, %458 : vector<4x512xf32>
    %460 = vector.extract_strided_slice %12 {offsets = [0, 31], sizes = [4, 1], strides = [1, 1]} : vector<4x36xf32> to vector<4x1xf32>
    %461 = vector.extract_strided_slice %441 {offsets = [3, 0], sizes = [1, 512], strides = [1, 1]} : vector<4x512xf32> to vector<1x512xf32>
    %462 = vector.broadcast %460 : vector<4x1xf32> to vector<4x512xf32>
    %463 = vector.broadcast %461 : vector<1x512xf32> to vector<4x512xf32>
    %464 = arith.mulf %462, %463 : vector<4x512xf32>
    %465 = arith.addf %438, %464 : vector<4x512xf32>
    %c495_i32_18 = arith.constant 495 : i32
    %466 = tpu.dynamic_rotate %256 by %c495_i32_18 dim 1 : vector<4x512xf32>, i32 -> vector<4x512xf32>
    %467 = vector.broadcast %8 : vector<1x512xf32> to vector<4x512xf32>
    %468 = arith.mulf %466, %467 : vector<4x512xf32>
    %469 = vector.extract_strided_slice %12 {offsets = [0, 32], sizes = [4, 1], strides = [1, 1]} : vector<4x36xf32> to vector<4x1xf32>
    %470 = vector.extract_strided_slice %468 {offsets = [0, 0], sizes = [1, 512], strides = [1, 1]} : vector<4x512xf32> to vector<1x512xf32>
    %471 = vector.broadcast %469 : vector<4x1xf32> to vector<4x512xf32>
    %472 = vector.broadcast %470 : vector<1x512xf32> to vector<4x512xf32>
    %473 = arith.mulf %471, %472 : vector<4x512xf32>
    %474 = arith.addf %447, %473 : vector<4x512xf32>
    %475 = vector.extract_strided_slice %12 {offsets = [0, 33], sizes = [4, 1], strides = [1, 1]} : vector<4x36xf32> to vector<4x1xf32>
    %476 = vector.extract_strided_slice %468 {offsets = [1, 0], sizes = [1, 512], strides = [1, 1]} : vector<4x512xf32> to vector<1x512xf32>
    %477 = vector.broadcast %475 : vector<4x1xf32> to vector<4x512xf32>
    %478 = vector.broadcast %476 : vector<1x512xf32> to vector<4x512xf32>
    %479 = arith.mulf %477, %478 : vector<4x512xf32>
    %480 = arith.addf %453, %479 : vector<4x512xf32>
    %481 = vector.extract_strided_slice %12 {offsets = [0, 34], sizes = [4, 1], strides = [1, 1]} : vector<4x36xf32> to vector<4x1xf32>
    %482 = vector.extract_strided_slice %468 {offsets = [2, 0], sizes = [1, 512], strides = [1, 1]} : vector<4x512xf32> to vector<1x512xf32>
    %483 = vector.broadcast %481 : vector<4x1xf32> to vector<4x512xf32>
    %484 = vector.broadcast %482 : vector<1x512xf32> to vector<4x512xf32>
    %485 = arith.mulf %483, %484 : vector<4x512xf32>
    %486 = arith.addf %459, %485 : vector<4x512xf32>
    %487 = vector.extract_strided_slice %12 {offsets = [0, 35], sizes = [4, 1], strides = [1, 1]} : vector<4x36xf32> to vector<4x1xf32>
    %488 = vector.extract_strided_slice %468 {offsets = [3, 0], sizes = [1, 512], strides = [1, 1]} : vector<4x512xf32> to vector<1x512xf32>
    %489 = vector.broadcast %487 : vector<4x1xf32> to vector<4x512xf32>
    %490 = vector.broadcast %488 : vector<1x512xf32> to vector<4x512xf32>
    %491 = arith.mulf %489, %490 : vector<4x512xf32>
    %492 = arith.addf %465, %491 : vector<4x512xf32>
    %493 = arith.addf %474, %480 : vector<4x512xf32>
    %494 = arith.addf %486, %492 : vector<4x512xf32>
    %495 = arith.addf %493, %494 : vector<4x512xf32>
    %496 = vector.broadcast %13 : vector<4x1xf32> to vector<4x512xf32>
    %497 = arith.addf %495, %496 : vector<4x512xf32>
    %498 = arith.addf %497, %9 : vector<4x512xf32>
    %c0_19 = arith.constant 0 : index
    %c0_20 = arith.constant 0 : index
    %499 = vector.load %arg7[%c0_19, %c0_20] : memref<4x512xf32, #tpu.memory_space<vmem>>, vector<4x512xf32>
    tpu.vector_store %arg7[%c0_19, %c0_20], %498 {strides = array<i32>} : memref<4x512xf32, #tpu.memory_space<vmem>>, vector<4x512xf32>,
    return
  }
  func.func @transform_0(%arg0: i32) -> (i32, i32) {
    %c0_i32 = arith.constant 0 : i32
    %c0_i32_0 = arith.constant 0 : i32
    %c0_i32_1 = arith.constant 0 : i32
    return %c0_i32, %c0_i32_0 : i32, i32
  }
  func.func @transform_1(%arg0: i32) -> (i32, i32) {
    %c0_i32 = arith.constant 0 : i32
    %c0_i32_0 = arith.constant 0 : i32
    return %c0_i32, %arg0 : i32, i32
  }
  func.func @transform_2(%arg0: i32) -> (i32, i32) {
    %c0_i32 = arith.constant 0 : i32
    %c0_i32_0 = arith.constant 0 : i32
    %c0_i32_1 = arith.constant 0 : i32
    return %c0_i32, %c0_i32_0 : i32, i32
  }
  func.func @transform_3(%arg0: i32) -> (i32, i32) {
    %c0_i32 = arith.constant 0 : i32
    %c0_i32_0 = arith.constant 0 : i32
    %c0_i32_1 = arith.constant 0 : i32
    return %c0_i32, %c0_i32_0 : i32, i32
  }
  func.func @transform_4(%arg0: i32) -> (i32, i32) {
    %c0_i32 = arith.constant 0 : i32
    %c0_i32_0 = arith.constant 0 : i32
    %c0_i32_1 = arith.constant 0 : i32
    return %c0_i32, %c0_i32_0 : i32, i32
  }
  func.func @transform_5(%arg0: i32) -> (i32, i32) {
    %c0_i32 = arith.constant 0 : i32
    %c0_i32_0 = arith.constant 0 : i32
    %c0_i32_1 = arith.constant 0 : i32
    return %c0_i32, %c0_i32_0 : i32, i32
  }
  func.func @transform_6(%arg0: i32) -> (i32, i32) {
    %c0_i32 = arith.constant 0 : i32
    %c0_i32_0 = arith.constant 0 : i32
    return %c0_i32, %arg0 : i32, i32
  }
}

</mosaic_0001>

<llo_original>
// kernel: tpu_custom_call.1
$region0: #{tpu_custom_call.1}
  #allocation0 [shape = 'u32[]', space=smem, size = 0x4, offset = 0x4, fixed_abs, tag = 'smem constant byte address 0x4 - core index']
  #allocation1 [shape = 'u32[72,128]{1,0:T(1,128)}', space=vmem, size = 0x9000, scoped, tag = 'internal scratch']
  %s0 = inlined_call_operand.hbm [shape: f32[8,512], index: 0, kind: input, shape index: {}]
  %s1 = inlined_call_operand.hbm [shape: f32[4,512], index: 1, kind: input, shape index: {}]
  %s2 = inlined_call_operand.vmem [shape: f32[4,36], index: 2, kind: input, shape index: {}]
  %s3 = inlined_call_operand.vmem [shape: f32[4,1], index: 3, kind: input, shape index: {}]
  %s4 = inlined_call_operand.vmem [shape: f32[4,36], index: 4, kind: input, shape index: {}]
  %s5 = inlined_call_operand.vmem [shape: f32[4,1], index: 5, kind: input, shape index: {}]
  %s6 = inlined_call_operand.hbm [shape: f32[4,512], index: 6, kind: output, shape index: {}]
  %s7 = sld [smem:[#allocation0]]
  $region42: #{tpu_custom_call.1} parent=0
    _
  %s9 = ssub.s32 1, %s7
  %s10 = scalar_select 0, %s9, %s7
  $region1: #{tpu_custom_call.1} parent=0
    #allocation2 [shape = 'u8[16384]{0}', space=vmem, size = 0x4000, scoped, tag = 'input window, operand 0, single buffered']
    #allocation3 [shape = 's32[1]{0}', space=sflag, size = 0x4, scoped, tag = 'scoped memory for tpu_custom_call.1']
    #allocation4 [shape = 's32[1]{0}', space=sflag, size = 0x4, scoped, tag = 'scoped memory for tpu_custom_call.1']
    #allocation5 [shape = 'u8[8192]{0}', space=vmem, size = 0x2000, scoped, tag = 'input window, operand 1, single buffered']
    #allocation6 [shape = 's32[1]{0}', space=sflag, size = 0x4, scoped, tag = 'scoped memory for tpu_custom_call.1']
    #allocation7 [shape = 'u8[8192]{0}', space=vmem, size = 0x2000, scoped, tag = 'output window, operand 0, single buffered']
    %11 = vsyncpa [#allocation3], 0
    %12 = vsyncpa [#allocation6], 0
    %13 = vsyncpa [#allocation4], 0
    // Predicated region
    $region2: #{tpu_custom_call.1} parent=1 // pred_check
      _
    $region3: #{tpu_custom_call.1} parent=1 // pred_check_branch
      %15 = sbr.rel (0) target = $region5
    $region4: #{tpu_custom_call.1} parent=1 // pred_region
      %17 = vsyncadd [#allocation3], 0
      %s19 = sshll.u32 %s0, 4
      %s20 = int_to_ptr.hbm [resolvable:$true] %s19
      %s21 = sshll.u32 [#allocation2], 4
      %s22 = int_to_ptr.vmem [resolvable:$true] %s21
      %24 = dma.hbm_to_vmem [thread:$0]  %s20, 512, %s22, [#allocation3]
    $region5: #{tpu_custom_call.1} parent=1 // pred_fallthru
      _
    // Predicated region
    $region6: #{tpu_custom_call.1} parent=1 // pred_check
      _
    $region7: #{tpu_custom_call.1} parent=1 // pred_check_branch
      %26 = sbr.rel (0) target = $region9
    $region8: #{tpu_custom_call.1} parent=1 // pred_region
      %28 = vsyncadd [#allocation6], 0
      %s30 = sshll.u32 %s1, 4
      %s31 = int_to_ptr.hbm [resolvable:$true] %s30
      %s32 = sshll.u32 [#allocation5], 4
      %s33 = int_to_ptr.vmem [resolvable:$true] %s32
      %35 = dma.hbm_to_vmem [thread:$0]  %s31, 256, %s33, [#allocation6]
    $region9: #{tpu_custom_call.1} parent=1 // pred_fallthru
      _
    // Predicated region
    $region10: #{tpu_custom_call.1} parent=1 // pred_check
      _
    $region11: #{tpu_custom_call.1} parent=1 // pred_check_branch
      %37 = sbr.rel (0) target = $region13
    $region12: #{tpu_custom_call.1} parent=1 // pred_region
      _
    $region13: #{tpu_custom_call.1} parent=1 // pred_fallthru
      _
    // Predicated region
    $region14: #{tpu_custom_call.1} parent=1 // pred_check
      _
    $region15: #{tpu_custom_call.1} parent=1 // pred_check_branch
      %39 = sbr.rel (0) target = $region17
    $region16: #{tpu_custom_call.1} parent=1 // pred_region
      _
    $region17: #{tpu_custom_call.1} parent=1 // pred_fallthru
      _
    // Predicated region
    $region18: #{tpu_custom_call.1} parent=1 // pred_check
      _
    $region19: #{tpu_custom_call.1} parent=1 // pred_check_branch
      %41 = sbr.rel (0) target = $region21
    $region20: #{tpu_custom_call.1} parent=1 // pred_region
      _
    $region21: #{tpu_custom_call.1} parent=1 // pred_fallthru
      _
    // Predicated region
    $region22: #{tpu_custom_call.1} parent=1 // pred_check
      _
    $region23: #{tpu_custom_call.1} parent=1 // pred_check_branch
      %43 = sbr.rel (0) target = $region25
    $region24: #{tpu_custom_call.1} parent=1 // pred_region
      _
    $region25: #{tpu_custom_call.1} parent=1 // pred_fallthru
      _
    // Predicated region
    $region26: #{tpu_custom_call.1} parent=1 // pred_check
      _
    $region27: #{tpu_custom_call.1} parent=1 // pred_check_branch
      %45 = sbr.rel (0) target = $region29
    $region28: #{tpu_custom_call.1} parent=1 // pred_region
      %47 = dma.done [#allocation3], 512
    $region29: #{tpu_custom_call.1} parent=1 // pred_fallthru
      _
    // Predicated region
    $region30: #{tpu_custom_call.1} parent=1 // pred_check
      _
    $region31: #{tpu_custom_call.1} parent=1 // pred_check_branch
      %49 = sbr.rel (0) target = $region33
    $region32: #{tpu_custom_call.1} parent=1 // pred_region
      %51 = dma.done [#allocation6], 256
    $region33: #{tpu_custom_call.1} parent=1 // pred_fallthru
      _
    %v52 = vld [vmem:[#allocation2] sm:$0xff]
    %v53 = vld [vmem:[#allocation2 + $0x8] sm:$0xff]
    %v54 = vld [vmem:[#allocation2 + $0x10] sm:$0xff]
    %v55 = vld [vmem:[#allocation2 + $0x18] sm:$0xff]
    %v56 = vld [vmem:[#allocation5] sm:$0xff]
    %v57 = vld [vmem:[#allocation5 + $0x8] sm:$0xff]
    %v58 = vld [vmem:[%s2] sm:$0xf]
    %v59 = vld [vmem:[%s3] sm:$0xf]
    %v60 = vld [vmem:[%s4] sm:$0xf]
    %v61 = vld [vmem:[%s5] sm:$0xf]
    %64 = vst [vmem:[#allocation1] ss:$2 sm:$0xff] %v56
    %s65 = scalar_lea.vmem [#allocation1], 16
    %66 = vst [vmem:[%s65] ss:$2 sm:$0xff] %v57
    %v67 = vld.sshfl [vmem:[#allocation1] sm:$0xff pattern:$0x75316420]
    %v68 = vld.sshfl [vmem:[#allocation1 + $0x8] sm:$0xff pattern:$0x75316420]
    %v69 = vld.sshfl [vmem:[#allocation1 + $0x10] sm:$0xff pattern:$0x75316420]
    %v70 = vld.sshfl [vmem:[#allocation1 + $0x18] sm:$0xff pattern:$0x75316420]
    %75 = vrot.lane.b32.xlu0 %v67, 17
    %v76 = vpop.permute.xlu0 %75
    %77 = vrot.lane.b32.xlu0 %v68, 17
    %v78 = vpop.permute.xlu0 %77
    %79 = vrot.lane.b32.xlu0 %v69, 17
    %v80 = vpop.permute.xlu0 %79
    %81 = vrot.lane.b32.xlu0 %v70, 17
    %v82 = vpop.permute.xlu0 %81
    %v83 = vlaneseq
    %v84 = vand.u32 %v83, 127
    %vm85 = vcmp.lt.s32.totalorder %v84, 17
    %v86 = vsel %vm85, %v80, %v82
    %v87 = vsel %vm85, %v78, %v80
    %v88 = vsel %vm85, %v76, %v78
    %v89 = vsel %vm85, %v82, %v76
    %v90 = vperm.slane %v52, 0
    %v91 = vperm.slane %v53, 0
    %v92 = vperm.slane %v54, 0
    %v93 = vperm.slane %v55, 0
    %v94 = vmul.f32 %v89, %v90
    %v95 = vmul.f32 %v88, %v91
    %v96 = vmul.f32 %v87, %v92
    %v97 = vmul.f32 %v86, %v93
    %99 = vset.pattern.permute.xlu0 0
    %100 = vperm.xlu0 %99, %v58
    %v101 = vpop.permute.xlu0 %100
    %v103 = vperm.slane %v94, 0
    %v104 = vperm.slane %v95, 0
    %v105 = vperm.slane %v96, 0
    %v106 = vperm.slane %v97, 0
    %v107 = vmul.f32 %v101, %v103
    %v108 = vmul.f32 %v101, %v104
    %v109 = vmul.f32 %v101, %v105
    %v110 = vmul.f32 %v101, %v106
    %111 = vset.pattern.permute.xlu0 1
    %112 = vperm.xlu0 %111, %v58
    %v113 = vpop.permute.xlu0 %112
    %v115 = vperm.slane %v94, 1
    %v116 = vperm.slane %v95, 1
    %v117 = vperm.slane %v96, 1
    %v118 = vperm.slane %v97, 1
    %v119 = vmul.f32 %v113, %v115
    %v120 = vmul.f32 %v113, %v116
    %v121 = vmul.f32 %v113, %v117
    %v122 = vmul.f32 %v113, %v118
    %123 = vset.pattern.permute.xlu0 2
    %124 = vperm.xlu0 %123, %v58
    %v125 = vpop.permute.xlu0 %124
    %v127 = vperm.slane %v94, 2
    %v128 = vperm.slane %v95, 2
    %v129 = vperm.slane %v96, 2
    %v130 = vperm.slane %v97, 2
    %v131 = vmul.f32 %v125, %v127
    %v132 = vmul.f32 %v125, %v128
    %v133 = vmul.f32 %v125, %v129
    %v134 = vmul.f32 %v125, %v130
    %135 = vset.pattern.permute.xlu0 3
    %136 = vperm.xlu0 %135, %v58
    %v137 = vpop.permute.xlu0 %136
    %v139 = vperm.slane %v94, 3
    %v140 = vperm.slane %v95, 3
    %v141 = vperm.slane %v96, 3
    %v142 = vperm.slane %v97, 3
    %v143 = vmul.f32 %v137, %v139
    %v144 = vmul.f32 %v137, %v140
    %v145 = vmul.f32 %v137, %v141
    %v146 = vmul.f32 %v137, %v142
    %147 = vst [vmem:[#allocation1] ss:$2 sm:$0xff] %v56
    %s148 = scalar_lea.vmem [#allocation1], 16
    %149 = vst [vmem:[%s148] ss:$2 sm:$0xff] %v57
    %v150 = vld.sshfl [vmem:[#allocation1] sm:$0xff pattern:$0x75316420]
    %v151 = vld.sshfl [vmem:[#allocation1 + $0x8] sm:$0xff pattern:$0x75316420]
    %v152 = vld.sshfl [vmem:[#allocation1 + $0x10] sm:$0xff pattern:$0x75316420]
    %v153 = vld.sshfl [vmem:[#allocation1 + $0x18] sm:$0xff pattern:$0x75316420]
    %158 = vrot.lane.b32.xlu0 %v150, 16
    %v159 = vpop.permute.xlu0 %158
    %160 = vrot.lane.b32.xlu0 %v151, 16
    %v161 = vpop.permute.xlu0 %160
    %162 = vrot.lane.b32.xlu0 %v152, 16
    %v163 = vpop.permute.xlu0 %162
    %164 = vrot.lane.b32.xlu0 %v153, 16
    %v165 = vpop.permute.xlu0 %164
    %vm166 = vcmp.lt.s32.totalorder %v84, 16
    %v167 = vsel %vm166, %v163, %v165
    %v168 = vsel %vm166, %v161, %v163
    %v169 = vsel %vm166, %v159, %v161
    %v170 = vsel %vm166, %v165, %v159
    %v171 = vperm.slane %v52, 1
    %v172 = vperm.slane %v53, 1
    %v173 = vperm.slane %v54, 1
    %v174 = vperm.slane %v55, 1
    %v175 = vmul.f32 %v170, %v171
    %v176 = vmul.f32 %v169, %v172
    %v177 = vmul.f32 %v168, %v173
    %v178 = vmul.f32 %v167, %v174
    %179 = vset.pattern.permute.xlu0 4
    %180 = vperm.xlu0 %179, %v58
    %v181 = vpop.permute.xlu0 %180
    %v183 = vperm.slane %v175, 0
    %v184 = vperm.slane %v176, 0
    %v185 = vperm.slane %v177, 0
    %v186 = vperm.slane %v178, 0
    %v187 = vmul.f32 %v181, %v183
    %v188 = vmul.f32 %v181, %v184
    %v189 = vmul.f32 %v181, %v185
    %v190 = vmul.f32 %v181, %v186
    %v191 = vadd.f32 %v107, %v187
    %v192 = vadd.f32 %v108, %v188
    %v193 = vadd.f32 %v109, %v189
    %v194 = vadd.f32 %v110, %v190
    %195 = vset.pattern.permute.xlu0 5
    %196 = vperm.xlu0 %195, %v58
    %v197 = vpop.permute.xlu0 %196
    %v199 = vperm.slane %v175, 1
    %v200 = vperm.slane %v176, 1
    %v201 = vperm.slane %v177, 1
    %v202 = vperm.slane %v178, 1
    %v203 = vmul.f32 %v197, %v199
    %v204 = vmul.f32 %v197, %v200
    %v205 = vmul.f32 %v197, %v201
    %v206 = vmul.f32 %v197, %v202
    %v207 = vadd.f32 %v119, %v203
    %v208 = vadd.f32 %v120, %v204
    %v209 = vadd.f32 %v121, %v205
    %v210 = vadd.f32 %v122, %v206
    %211 = vset.pattern.permute.xlu0 6
    %212 = vperm.xlu0 %211, %v58
    %v213 = vpop.permute.xlu0 %212
    %v215 = vperm.slane %v175, 2
    %v216 = vperm.slane %v176, 2
    %v217 = vperm.slane %v177, 2
    %v218 = vperm.slane %v178, 2
    %v219 = vmul.f32 %v213, %v215
    %v220 = vmul.f32 %v213, %v216
    %v221 = vmul.f32 %v213, %v217
    %v222 = vmul.f32 %v213, %v218
    %v223 = vadd.f32 %v131, %v219
    %v224 = vadd.f32 %v132, %v220
    %v225 = vadd.f32 %v133, %v221
    %v226 = vadd.f32 %v134, %v222
    %227 = vset.pattern.permute.xlu0 7
    %228 = vperm.xlu0 %227, %v58
    %v229 = vpop.permute.xlu0 %228
    %v231 = vperm.slane %v175, 3
    %v232 = vperm.slane %v176, 3
    %v233 = vperm.slane %v177, 3
    %v234 = vperm.slane %v178, 3
    %v235 = vmul.f32 %v229, %v231
    %v236 = vmul.f32 %v229, %v232
    %v237 = vmul.f32 %v229, %v233
    %v238 = vmul.f32 %v229, %v234
    %v239 = vadd.f32 %v143, %v235
    %v240 = vadd.f32 %v144, %v236
    %v241 = vadd.f32 %v145, %v237
    %v242 = vadd.f32 %v146, %v238
    %243 = vst [vmem:[#allocation1] ss:$2 sm:$0xff] %v56
    %s244 = scalar_lea.vmem [#allocation1], 16
    %245 = vst [vmem:[%s244] ss:$2 sm:$0xff] %v57
    %v246 = vld.sshfl [vmem:[#allocation1] sm:$0xff pattern:$0x75316420]
    %v247 = vld.sshfl [vmem:[#allocation1 + $0x8] sm:$0xff pattern:$0x75316420]
    %v248 = vld.sshfl [vmem:[#allocation1 + $0x10] sm:$0xff pattern:$0x75316420]
    %v249 = vld.sshfl [vmem:[#allocation1 + $0x18] sm:$0xff pattern:$0x75316420]
    %254 = vrot.lane.b32.xlu0 %v246, 15
    %v255 = vpop.permute.xlu0 %254
    %256 = vrot.lane.b32.xlu0 %v247, 15
    %v257 = vpop.permute.xlu0 %256
    %258 = vrot.lane.b32.xlu0 %v248, 15
    %v259 = vpop.permute.xlu0 %258
    %260 = vrot.lane.b32.xlu0 %v249, 15
    %v261 = vpop.permute.xlu0 %260
    %vm262 = vcmp.lt.s32.totalorder %v84, 15
    %v263 = vsel %vm262, %v259, %v261
    %v264 = vsel %vm262, %v257, %v259
    %v265 = vsel %vm262, %v255, %v257
    %v266 = vsel %vm262, %v261, %v255
    %v267 = vperm.slane %v52, 2
    %v268 = vperm.slane %v53, 2
    %v269 = vperm.slane %v54, 2
    %v270 = vperm.slane %v55, 2
    %v271 = vmul.f32 %v266, %v267
    %v272 = vmul.f32 %v265, %v268
    %v273 = vmul.f32 %v264, %v269
    %v274 = vmul.f32 %v263, %v270
    %275 = vset.pattern.permute.xlu0 8
    %276 = vperm.xlu0 %275, %v58
    %v277 = vpop.permute.xlu0 %276
    %v279 = vperm.slane %v271, 0
    %v280 = vperm.slane %v272, 0
    %v281 = vperm.slane %v273, 0
    %v282 = vperm.slane %v274, 0
    %v283 = vmul.f32 %v277, %v279
    %v284 = vmul.f32 %v277, %v280
    %v285 = vmul.f32 %v277, %v281
    %v286 = vmul.f32 %v277, %v282
    %v287 = vadd.f32 %v191, %v283
    %v288 = vadd.f32 %v192, %v284
    %v289 = vadd.f32 %v193, %v285
    %v290 = vadd.f32 %v194, %v286
    %291 = vset.pattern.permute.xlu0 9
    %292 = vperm.xlu0 %291, %v58
    %v293 = vpop.permute.xlu0 %292
    %v295 = vperm.slane %v271, 1
    %v296 = vperm.slane %v272, 1
    %v297 = vperm.slane %v273, 1
    %v298 = vperm.slane %v274, 1
    %v299 = vmul.f32 %v293, %v295
    %v300 = vmul.f32 %v293, %v296
    %v301 = vmul.f32 %v293, %v297
    %v302 = vmul.f32 %v293, %v298
    %v303 = vadd.f32 %v207, %v299
    %v304 = vadd.f32 %v208, %v300
    %v305 = vadd.f32 %v209, %v301
    %v306 = vadd.f32 %v210, %v302
    %307 = vset.pattern.permute.xlu0 10
    %308 = vperm.xlu0 %307, %v58
    %v309 = vpop.permute.xlu0 %308
    %v311 = vperm.slane %v271, 2
    %v312 = vperm.slane %v272, 2
    %v313 = vperm.slane %v273, 2
    %v314 = vperm.slane %v274, 2
    %v315 = vmul.f32 %v309, %v311
    %v316 = vmul.f32 %v309, %v312
    %v317 = vmul.f32 %v309, %v313
    %v318 = vmul.f32 %v309, %v314
    %v319 = vadd.f32 %v223, %v315
    %v320 = vadd.f32 %v224, %v316
    %v321 = vadd.f32 %v225, %v317
    %v322 = vadd.f32 %v226, %v318
    %323 = vset.pattern.permute.xlu0 11
    %324 = vperm.xlu0 %323, %v58
    %v325 = vpop.permute.xlu0 %324
    %v327 = vperm.slane %v271, 3
    %v328 = vperm.slane %v272, 3
    %v329 = vperm.slane %v273, 3
    %v330 = vperm.slane %v274, 3
    %v331 = vmul.f32 %v325, %v327
    %v332 = vmul.f32 %v325, %v328
    %v333 = vmul.f32 %v325, %v329
    %v334 = vmul.f32 %v325, %v330
    %v335 = vadd.f32 %v239, %v331
    %v336 = vadd.f32 %v240, %v332
    %v337 = vadd.f32 %v241, %v333
    %v338 = vadd.f32 %v242, %v334
    %339 = vst [vmem:[#allocation1] ss:$2 sm:$0xff] %v56
    %s340 = scalar_lea.vmem [#allocation1], 16
    %341 = vst [vmem:[%s340] ss:$2 sm:$0xff] %v57
    %v342 = vld.sshfl [vmem:[#allocation1] sm:$0xff pattern:$0x75316420]
    %v343 = vld.sshfl [vmem:[#allocation1 + $0x8] sm:$0xff pattern:$0x75316420]
    %v344 = vld.sshfl [vmem:[#allocation1 + $0x10] sm:$0xff pattern:$0x75316420]
    %v345 = vld.sshfl [vmem:[#allocation1 + $0x18] sm:$0xff pattern:$0x75316420]
    %350 = vrot.lane.b32.xlu0 %v342, 1
    %v351 = vpop.permute.xlu0 %350
    %352 = vrot.lane.b32.xlu0 %v343, 1
    %v353 = vpop.permute.xlu0 %352
    %354 = vrot.lane.b32.xlu0 %v344, 1
    %v355 = vpop.permute.xlu0 %354
    %356 = vrot.lane.b32.xlu0 %v345, 1
    %v357 = vpop.permute.xlu0 %356
    %vm358 = vcmp.lt.s32.totalorder %v84, 1
    %v359 = vsel %vm358, %v355, %v357
    %v360 = vsel %vm358, %v353, %v355
    %v361 = vsel %vm358, %v351, %v353
    %v362 = vsel %vm358, %v357, %v351
    %v363 = vperm.slane %v52, 3
    %v364 = vperm.slane %v53, 3
    %v365 = vperm.slane %v54, 3
    %v366 = vperm.slane %v55, 3
    %v367 = vmul.f32 %v362, %v363
    %v368 = vmul.f32 %v361, %v364
    %v369 = vmul.f32 %v360, %v365
    %v370 = vmul.f32 %v359, %v366
    %371 = vset.pattern.permute.xlu0 12
    %372 = vperm.xlu0 %371, %v58
    %v373 = vpop.permute.xlu0 %372
    %v375 = vperm.slane %v367, 0
    %v376 = vperm.slane %v368, 0
    %v377 = vperm.slane %v369, 0
    %v378 = vperm.slane %v370, 0
    %v379 = vmul.f32 %v373, %v375
    %v380 = vmul.f32 %v373, %v376
    %v381 = vmul.f32 %v373, %v377
    %v382 = vmul.f32 %v373, %v378
    %v383 = vadd.f32 %v287, %v379
    %v384 = vadd.f32 %v288, %v380
    %v385 = vadd.f32 %v289, %v381
    %v386 = vadd.f32 %v290, %v382
    %387 = vset.pattern.permute.xlu0 13
    %388 = vperm.xlu0 %387, %v58
    %v389 = vpop.permute.xlu0 %388
    %v391 = vperm.slane %v367, 1
    %v392 = vperm.slane %v368, 1
    %v393 = vperm.slane %v369, 1
    %v394 = vperm.slane %v370, 1
    %v395 = vmul.f32 %v389, %v391
    %v396 = vmul.f32 %v389, %v392
    %v397 = vmul.f32 %v389, %v393
    %v398 = vmul.f32 %v389, %v394
    %v399 = vadd.f32 %v303, %v395
    %v400 = vadd.f32 %v304, %v396
    %v401 = vadd.f32 %v305, %v397
    %v402 = vadd.f32 %v306, %v398
    %403 = vset.pattern.permute.xlu0 14
    %404 = vperm.xlu0 %403, %v58
    %v405 = vpop.permute.xlu0 %404
    %v407 = vperm.slane %v367, 2
    %v408 = vperm.slane %v368, 2
    %v409 = vperm.slane %v369, 2
    %v410 = vperm.slane %v370, 2
    %v411 = vmul.f32 %v405, %v407
    %v412 = vmul.f32 %v405, %v408
    %v413 = vmul.f32 %v405, %v409
    %v414 = vmul.f32 %v405, %v410
    %v415 = vadd.f32 %v319, %v411
    %v416 = vadd.f32 %v320, %v412
    %v417 = vadd.f32 %v321, %v413
    %v418 = vadd.f32 %v322, %v414
    %419 = vset.pattern.permute.xlu0 15
    %420 = vperm.xlu0 %419, %v58
    %v421 = vpop.permute.xlu0 %420
    %v423 = vperm.slane %v367, 3
    %v424 = vperm.slane %v368, 3
    %v425 = vperm.slane %v369, 3
    %v426 = vperm.slane %v370, 3
    %v427 = vmul.f32 %v421, %v423
    %v428 = vmul.f32 %v421, %v424
    %v429 = vmul.f32 %v421, %v425
    %v430 = vmul.f32 %v421, %v426
    %v431 = vadd.f32 %v335, %v427
    %v432 = vadd.f32 %v336, %v428
    %v433 = vadd.f32 %v337, %v429
    %v434 = vadd.f32 %v338, %v430
    %435 = vset.pattern.permute.xlu0 16
    %436 = vperm.xlu0 %435, %v58
    %v437 = vpop.permute.xlu0 %436
    %v439 = vperm.slane %v56, 0
    %v440 = vperm.slane %v56, 4
    %v441 = vperm.slane %v57, 0
    %v442 = vperm.slane %v57, 4
    %v447 = vperm.slane %v439, 0
    %v448 = vperm.slane %v440, 0
    %v449 = vperm.slane %v441, 0
    %v450 = vperm.slane %v442, 0
    %v451 = vmul.f32 %v437, %v447
    %v452 = vmul.f32 %v437, %v448
    %v453 = vmul.f32 %v437, %v449
    %v454 = vmul.f32 %v437, %v450
    %v455 = vadd.f32 %v383, %v451
    %v456 = vadd.f32 %v384, %v452
    %v457 = vadd.f32 %v385, %v453
    %v458 = vadd.f32 %v386, %v454
    %459 = vset.pattern.permute.xlu0 17
    %460 = vperm.xlu0 %459, %v58
    %v461 = vpop.permute.xlu0 %460
    %v463 = vperm.slane %v56, 1
    %v464 = vperm.slane %v56, 5
    %v465 = vperm.slane %v57, 1
    %v466 = vperm.slane %v57, 5
    %v471 = vperm.slane %v463, 1
    %v472 = vperm.slane %v464, 1
    %v473 = vperm.slane %v465, 1
    %v474 = vperm.slane %v466, 1
    %v475 = vmul.f32 %v461, %v471
    %v476 = vmul.f32 %v461, %v472
    %v477 = vmul.f32 %v461, %v473
    %v478 = vmul.f32 %v461, %v474
    %v479 = vadd.f32 %v399, %v475
    %v480 = vadd.f32 %v400, %v476
    %v481 = vadd.f32 %v401, %v477
    %v482 = vadd.f32 %v402, %v478
    %483 = vset.pattern.permute.xlu0 18
    %484 = vperm.xlu0 %483, %v58
    %v485 = vpop.permute.xlu0 %484
    %v487 = vperm.slane %v56, 2
    %v488 = vperm.slane %v56, 6
    %v489 = vperm.slane %v57, 2
    %v490 = vperm.slane %v57, 6
    %v495 = vperm.slane %v487, 2
    %v496 = vperm.slane %v488, 2
    %v497 = vperm.slane %v489, 2
    %v498 = vperm.slane %v490, 2
    %v499 = vmul.f32 %v485, %v495
    %v500 = vmul.f32 %v485, %v496
    %v501 = vmul.f32 %v485, %v497
    %v502 = vmul.f32 %v485, %v498
    %v503 = vadd.f32 %v415, %v499
    %v504 = vadd.f32 %v416, %v500
    %v505 = vadd.f32 %v417, %v501
    %v506 = vadd.f32 %v418, %v502
    %507 = vset.pattern.permute.xlu0 19
    %508 = vperm.xlu0 %507, %v58
    %v509 = vpop.permute.xlu0 %508
    %v511 = vperm.slane %v56, 3
    %v512 = vperm.slane %v56, 7
    %v513 = vperm.slane %v57, 3
    %v514 = vperm.slane %v57, 7
    %v519 = vperm.slane %v511, 3
    %v520 = vperm.slane %v512, 3
    %v521 = vperm.slane %v513, 3
    %v522 = vperm.slane %v514, 3
    %v523 = vmul.f32 %v509, %v519
    %v524 = vmul.f32 %v509, %v520
    %v525 = vmul.f32 %v509, %v521
    %v526 = vmul.f32 %v509, %v522
    %v527 = vadd.f32 %v431, %v523
    %v528 = vadd.f32 %v432, %v524
    %v529 = vadd.f32 %v433, %v525
    %v530 = vadd.f32 %v434, %v526
    %531 = vst [vmem:[#allocation1] ss:$2 sm:$0xff] %v56
    %s532 = scalar_lea.vmem [#allocation1], 16
    %533 = vst [vmem:[%s532] ss:$2 sm:$0xff] %v57
    %v534 = vld.sshfl [vmem:[#allocation1] sm:$0xff pattern:$0x75316420]
    %v535 = vld.sshfl [vmem:[#allocation1 + $0x8] sm:$0xff pattern:$0x75316420]
    %v536 = vld.sshfl [vmem:[#allocation1 + $0x10] sm:$0xff pattern:$0x75316420]
    %v537 = vld.sshfl [vmem:[#allocation1 + $0x18] sm:$0xff pattern:$0x75316420]
    %542 = vrot.lane.b32.xlu0 %v534, 127
    %v543 = vpop.permute.xlu0 %542
    %544 = vrot.lane.b32.xlu0 %v535, 127
    %v545 = vpop.permute.xlu0 %544
    %546 = vrot.lane.b32.xlu0 %v536, 127
    %v547 = vpop.permute.xlu0 %546
    %548 = vrot.lane.b32.xlu0 %v537, 127
    %v549 = vpop.permute.xlu0 %548
    %vm550 = vcmp.lt.s32.totalorder %v84, 127
    %v551 = vsel %vm550, %v547, %v549
    %v552 = vsel %vm550, %v545, %v547
    %v553 = vsel %vm550, %v543, %v545
    %v554 = vsel %vm550, %v549, %v543
    %v555 = vperm.slane %v52, 4
    %v556 = vperm.slane %v53, 4
    %v557 = vperm.slane %v54, 4
    %v558 = vperm.slane %v55, 4
    %v559 = vmul.f32 %v553, %v555
    %v560 = vmul.f32 %v552, %v556
    %v561 = vmul.f32 %v551, %v557
    %v562 = vmul.f32 %v554, %v558
    %563 = vset.pattern.permute.xlu0 20
    %564 = vperm.xlu0 %563, %v58
    %v565 = vpop.permute.xlu0 %564
    %v567 = vperm.slane %v559, 0
    %v568 = vperm.slane %v560, 0
    %v569 = vperm.slane %v561, 0
    %v570 = vperm.slane %v562, 0
    %v571 = vmul.f32 %v565, %v567
    %v572 = vmul.f32 %v565, %v568
    %v573 = vmul.f32 %v565, %v569
    %v574 = vmul.f32 %v565, %v570
    %v575 = vadd.f32 %v455, %v571
    %v576 = vadd.f32 %v456, %v572
    %v577 = vadd.f32 %v457, %v573
    %v578 = vadd.f32 %v458, %v574
    %579 = vset.pattern.permute.xlu0 21
    %580 = vperm.xlu0 %579, %v58
    %v581 = vpop.permute.xlu0 %580
    %v583 = vperm.slane %v559, 1
    %v584 = vperm.slane %v560, 1
    %v585 = vperm.slane %v561, 1
    %v586 = vperm.slane %v562, 1
    %v587 = vmul.f32 %v581, %v583
    %v588 = vmul.f32 %v581, %v584
    %v589 = vmul.f32 %v581, %v585
    %v590 = vmul.f32 %v581, %v586
    %v591 = vadd.f32 %v479, %v587
    %v592 = vadd.f32 %v480, %v588
    %v593 = vadd.f32 %v481, %v589
    %v594 = vadd.f32 %v482, %v590
    %595 = vset.pattern.permute.xlu0 22
    %596 = vperm.xlu0 %595, %v58
    %v597 = vpop.permute.xlu0 %596
    %v599 = vperm.slane %v559, 2
    %v600 = vperm.slane %v560, 2
    %v601 = vperm.slane %v561, 2
    %v602 = vperm.slane %v562, 2
    %v603 = vmul.f32 %v597, %v599
    %v604 = vmul.f32 %v597, %v600
    %v605 = vmul.f32 %v597, %v601
    %v606 = vmul.f32 %v597, %v602
    %v607 = vadd.f32 %v503, %v603
    %v608 = vadd.f32 %v504, %v604
    %v609 = vadd.f32 %v505, %v605
    %v610 = vadd.f32 %v506, %v606
    %611 = vset.pattern.permute.xlu0 23
    %612 = vperm.xlu0 %611, %v58
    %v613 = vpop.permute.xlu0 %612
    %v615 = vperm.slane %v559, 3
    %v616 = vperm.slane %v560, 3
    %v617 = vperm.slane %v561, 3
    %v618 = vperm.slane %v562, 3
    %v619 = vmul.f32 %v613, %v615
    %v620 = vmul.f32 %v613, %v616
    %v621 = vmul.f32 %v613, %v617
    %v622 = vmul.f32 %v613, %v618
    %v623 = vadd.f32 %v527, %v619
    %v624 = vadd.f32 %v528, %v620
    %v625 = vadd.f32 %v529, %v621
    %v626 = vadd.f32 %v530, %v622
    %627 = vst [vmem:[#allocation1] ss:$2 sm:$0xff] %v56
    %s628 = scalar_lea.vmem [#allocation1], 16
    %629 = vst [vmem:[%s628] ss:$2 sm:$0xff] %v57
    %v630 = vld.sshfl [vmem:[#allocation1] sm:$0xff pattern:$0x75316420]
    %v631 = vld.sshfl [vmem:[#allocation1 + $0x8] sm:$0xff pattern:$0x75316420]
    %v632 = vld.sshfl [vmem:[#allocation1 + $0x10] sm:$0xff pattern:$0x75316420]
    %v633 = vld.sshfl [vmem:[#allocation1 + $0x18] sm:$0xff pattern:$0x75316420]
    %638 = vrot.lane.b32.xlu0 %v630, 113
    %v639 = vpop.permute.xlu0 %638
    %640 = vrot.lane.b32.xlu0 %v631, 113
    %v641 = vpop.permute.xlu0 %640
    %642 = vrot.lane.b32.xlu0 %v632, 113
    %v643 = vpop.permute.xlu0 %642
    %644 = vrot.lane.b32.xlu0 %v633, 113
    %v645 = vpop.permute.xlu0 %644
    %vm646 = vcmp.lt.s32.totalorder %v84, 113
    %v647 = vsel %vm646, %v643, %v645
    %v648 = vsel %vm646, %v641, %v643
    %v649 = vsel %vm646, %v639, %v641
    %v650 = vsel %vm646, %v645, %v639
    %v651 = vperm.slane %v52, 5
    %v652 = vperm.slane %v53, 5
    %v653 = vperm.slane %v54, 5
    %v654 = vperm.slane %v55, 5
    %v655 = vmul.f32 %v649, %v651
    %v656 = vmul.f32 %v648, %v652
    %v657 = vmul.f32 %v647, %v653
    %v658 = vmul.f32 %v650, %v654
    %659 = vset.pattern.permute.xlu0 24
    %660 = vperm.xlu0 %659, %v58
    %v661 = vpop.permute.xlu0 %660
    %v663 = vperm.slane %v655, 0
    %v664 = vperm.slane %v656, 0
    %v665 = vperm.slane %v657, 0
    %v666 = vperm.slane %v658, 0
    %v667 = vmul.f32 %v661, %v663
    %v668 = vmul.f32 %v661, %v664
    %v669 = vmul.f32 %v661, %v665
    %v670 = vmul.f32 %v661, %v666
    %v671 = vadd.f32 %v575, %v667
    %v672 = vadd.f32 %v576, %v668
    %v673 = vadd.f32 %v577, %v669
    %v674 = vadd.f32 %v578, %v670
    %675 = vset.pattern.permute.xlu0 25
    %676 = vperm.xlu0 %675, %v58
    %v677 = vpop.permute.xlu0 %676
    %v679 = vperm.slane %v655, 1
    %v680 = vperm.slane %v656, 1
    %v681 = vperm.slane %v657, 1
    %v682 = vperm.slane %v658, 1
    %v683 = vmul.f32 %v677, %v679
    %v684 = vmul.f32 %v677, %v680
    %v685 = vmul.f32 %v677, %v681
    %v686 = vmul.f32 %v677, %v682
    %v687 = vadd.f32 %v591, %v683
    %v688 = vadd.f32 %v592, %v684
    %v689 = vadd.f32 %v593, %v685
    %v690 = vadd.f32 %v594, %v686
    %691 = vset.pattern.permute.xlu0 26
    %692 = vperm.xlu0 %691, %v58
    %v693 = vpop.permute.xlu0 %692
    %v695 = vperm.slane %v655, 2
    %v696 = vperm.slane %v656, 2
    %v697 = vperm.slane %v657, 2
    %v698 = vperm.slane %v658, 2
    %v699 = vmul.f32 %v693, %v695
    %v700 = vmul.f32 %v693, %v696
    %v701 = vmul.f32 %v693, %v697
    %v702 = vmul.f32 %v693, %v698
    %v703 = vadd.f32 %v607, %v699
    %v704 = vadd.f32 %v608, %v700
    %v705 = vadd.f32 %v609, %v701
    %v706 = vadd.f32 %v610, %v702
    %707 = vset.pattern.permute.xlu0 27
    %708 = vperm.xlu0 %707, %v58
    %v709 = vpop.permute.xlu0 %708
    %v711 = vperm.slane %v655, 3
    %v712 = vperm.slane %v656, 3
    %v713 = vperm.slane %v657, 3
    %v714 = vperm.slane %v658, 3
    %v715 = vmul.f32 %v709, %v711
    %v716 = vmul.f32 %v709, %v712
    %v717 = vmul.f32 %v709, %v713
    %v718 = vmul.f32 %v709, %v714
    %v719 = vadd.f32 %v623, %v715
    %v720 = vadd.f32 %v624, %v716
    %v721 = vadd.f32 %v625, %v717
    %v722 = vadd.f32 %v626, %v718
    %723 = vst [vmem:[#allocation1] ss:$2 sm:$0xff] %v56
    %s724 = scalar_lea.vmem [#allocation1], 16
    %725 = vst [vmem:[%s724] ss:$2 sm:$0xff] %v57
    %v726 = vld.sshfl [vmem:[#allocation1] sm:$0xff pattern:$0x75316420]
    %v727 = vld.sshfl [vmem:[#allocation1 + $0x8] sm:$0xff pattern:$0x75316420]
    %v728 = vld.sshfl [vmem:[#allocation1 + $0x10] sm:$0xff pattern:$0x75316420]
    %v729 = vld.sshfl [vmem:[#allocation1 + $0x18] sm:$0xff pattern:$0x75316420]
    %734 = vrot.lane.b32.xlu0 %v726, 112
    %v735 = vpop.permute.xlu0 %734
    %736 = vrot.lane.b32.xlu0 %v727, 112
    %v737 = vpop.permute.xlu0 %736
    %738 = vrot.lane.b32.xlu0 %v728, 112
    %v739 = vpop.permute.xlu0 %738
    %740 = vrot.lane.b32.xlu0 %v729, 112
    %v741 = vpop.permute.xlu0 %740
    %vm742 = vcmp.lt.s32.totalorder %v84, 112
    %v743 = vsel %vm742, %v739, %v741
    %v744 = vsel %vm742, %v737, %v739
    %v745 = vsel %vm742, %v735, %v737
    %v746 = vsel %vm742, %v741, %v735
    %v747 = vperm.slane %v52, 6
    %v748 = vperm.slane %v53, 6
    %v749 = vperm.slane %v54, 6
    %v750 = vperm.slane %v55, 6
    %v751 = vmul.f32 %v745, %v747
    %v752 = vmul.f32 %v744, %v748
    %v753 = vmul.f32 %v743, %v749
    %v754 = vmul.f32 %v746, %v750
    %755 = vset.pattern.permute.xlu0 28
    %756 = vperm.xlu0 %755, %v58
    %v757 = vpop.permute.xlu0 %756
    %v759 = vperm.slane %v751, 0
    %v760 = vperm.slane %v752, 0
    %v761 = vperm.slane %v753, 0
    %v762 = vperm.slane %v754, 0
    %v763 = vmul.f32 %v757, %v759
    %v764 = vmul.f32 %v757, %v760
    %v765 = vmul.f32 %v757, %v761
    %v766 = vmul.f32 %v757, %v762
    %v767 = vadd.f32 %v671, %v763
    %v768 = vadd.f32 %v672, %v764
    %v769 = vadd.f32 %v673, %v765
    %v770 = vadd.f32 %v674, %v766
    %771 = vset.pattern.permute.xlu0 29
    %772 = vperm.xlu0 %771, %v58
    %v773 = vpop.permute.xlu0 %772
    %v775 = vperm.slane %v751, 1
    %v776 = vperm.slane %v752, 1
    %v777 = vperm.slane %v753, 1
    %v778 = vperm.slane %v754, 1
    %v779 = vmul.f32 %v773, %v775
    %v780 = vmul.f32 %v773, %v776
    %v781 = vmul.f32 %v773, %v777
    %v782 = vmul.f32 %v773, %v778
    %v783 = vadd.f32 %v687, %v779
    %v784 = vadd.f32 %v688, %v780
    %v785 = vadd.f32 %v689, %v781
    %v786 = vadd.f32 %v690, %v782
    %787 = vset.pattern.permute.xlu0 30
    %788 = vperm.xlu0 %787, %v58
    %v789 = vpop.permute.xlu0 %788
    %v791 = vperm.slane %v751, 2
    %v792 = vperm.slane %v752, 2
    %v793 = vperm.slane %v753, 2
    %v794 = vperm.slane %v754, 2
    %v795 = vmul.f32 %v789, %v791
    %v796 = vmul.f32 %v789, %v792
    %v797 = vmul.f32 %v789, %v793
    %v798 = vmul.f32 %v789, %v794
    %v799 = vadd.f32 %v703, %v795
    %v800 = vadd.f32 %v704, %v796
    %v801 = vadd.f32 %v705, %v797
    %v802 = vadd.f32 %v706, %v798
    %803 = vset.pattern.permute.xlu0 31
    %804 = vperm.xlu0 %803, %v58
    %v805 = vpop.permute.xlu0 %804
    %v807 = vperm.slane %v751, 3
    %v808 = vperm.slane %v752, 3
    %v809 = vperm.slane %v753, 3
    %v810 = vperm.slane %v754, 3
    %v811 = vmul.f32 %v805, %v807
    %v812 = vmul.f32 %v805, %v808
    %v813 = vmul.f32 %v805, %v809
    %v814 = vmul.f32 %v805, %v810
    %v815 = vadd.f32 %v719, %v811
    %v816 = vadd.f32 %v720, %v812
    %v817 = vadd.f32 %v721, %v813
    %v818 = vadd.f32 %v722, %v814
    %819 = vst [vmem:[#allocation1] ss:$2 sm:$0xff] %v56
    %s820 = scalar_lea.vmem [#allocation1], 16
    %821 = vst [vmem:[%s820] ss:$2 sm:$0xff] %v57
    %v822 = vld.sshfl [vmem:[#allocation1] sm:$0xff pattern:$0x75316420]
    %v823 = vld.sshfl [vmem:[#allocation1 + $0x8] sm:$0xff pattern:$0x75316420]
    %v824 = vld.sshfl [vmem:[#allocation1 + $0x10] sm:$0xff pattern:$0x75316420]
    %v825 = vld.sshfl [vmem:[#allocation1 + $0x18] sm:$0xff pattern:$0x75316420]
    %830 = vrot.lane.b32.xlu0 %v822, 111
    %v831 = vpop.permute.xlu0 %830
    %832 = vrot.lane.b32.xlu0 %v823, 111
    %v833 = vpop.permute.xlu0 %832
    %834 = vrot.lane.b32.xlu0 %v824, 111
    %v835 = vpop.permute.xlu0 %834
    %836 = vrot.lane.b32.xlu0 %v825, 111
    %v837 = vpop.permute.xlu0 %836
    %vm838 = vcmp.lt.s32.totalorder %v84, 111
    %v839 = vsel %vm838, %v835, %v837
    %v840 = vsel %vm838, %v833, %v835
    %v841 = vsel %vm838, %v831, %v833
    %v842 = vsel %vm838, %v837, %v831
    %v843 = vperm.slane %v52, 7
    %v844 = vperm.slane %v53, 7
    %v845 = vperm.slane %v54, 7
    %v846 = vperm.slane %v55, 7
    %v847 = vmul.f32 %v841, %v843
    %v848 = vmul.f32 %v840, %v844
    %v849 = vmul.f32 %v839, %v845
    %v850 = vmul.f32 %v842, %v846
    %851 = vset.pattern.permute.xlu0 32
    %852 = vperm.xlu0 %851, %v58
    %v853 = vpop.permute.xlu0 %852
    %v855 = vperm.slane %v847, 0
    %v856 = vperm.slane %v848, 0
    %v857 = vperm.slane %v849, 0
    %v858 = vperm.slane %v850, 0
    %v859 = vmul.f32 %v853, %v855
    %v860 = vmul.f32 %v853, %v856
    %v861 = vmul.f32 %v853, %v857
    %v862 = vmul.f32 %v853, %v858
    %v863 = vadd.f32 %v767, %v859
    %v864 = vadd.f32 %v768, %v860
    %v865 = vadd.f32 %v769, %v861
    %v866 = vadd.f32 %v770, %v862
    %867 = vset.pattern.permute.xlu0 33
    %868 = vperm.xlu0 %867, %v58
    %v869 = vpop.permute.xlu0 %868
    %v871 = vperm.slane %v847, 1
    %v872 = vperm.slane %v848, 1
    %v873 = vperm.slane %v849, 1
    %v874 = vperm.slane %v850, 1
    %v875 = vmul.f32 %v869, %v871
    %v876 = vmul.f32 %v869, %v872
    %v877 = vmul.f32 %v869, %v873
    %v878 = vmul.f32 %v869, %v874
    %v879 = vadd.f32 %v783, %v875
    %v880 = vadd.f32 %v784, %v876
    %v881 = vadd.f32 %v785, %v877
    %v882 = vadd.f32 %v786, %v878
    %883 = vset.pattern.permute.xlu0 34
    %884 = vperm.xlu0 %883, %v58
    %v885 = vpop.permute.xlu0 %884
    %v887 = vperm.slane %v847, 2
    %v888 = vperm.slane %v848, 2
    %v889 = vperm.slane %v849, 2
    %v890 = vperm.slane %v850, 2
    %v891 = vmul.f32 %v885, %v887
    %v892 = vmul.f32 %v885, %v888
    %v893 = vmul.f32 %v885, %v889
    %v894 = vmul.f32 %v885, %v890
    %v895 = vadd.f32 %v799, %v891
    %v896 = vadd.f32 %v800, %v892
    %v897 = vadd.f32 %v801, %v893
    %v898 = vadd.f32 %v802, %v894
    %899 = vset.pattern.permute.xlu0 35
    %900 = vperm.xlu0 %899, %v58
    %v901 = vpop.permute.xlu0 %900
    %v903 = vperm.slane %v847, 3
    %v904 = vperm.slane %v848, 3
    %v905 = vperm.slane %v849, 3
    %v906 = vperm.slane %v850, 3
    %v907 = vmul.f32 %v901, %v903
    %v908 = vmul.f32 %v901, %v904
    %v909 = vmul.f32 %v901, %v905
    %v910 = vmul.f32 %v901, %v906
    %v911 = vadd.f32 %v815, %v907
    %v912 = vadd.f32 %v816, %v908
    %v913 = vadd.f32 %v817, %v909
    %v914 = vadd.f32 %v818, %v910
    %v915 = vadd.f32 %v863, %v879
    %v916 = vadd.f32 %v864, %v880
    %v917 = vadd.f32 %v865, %v881
    %v918 = vadd.f32 %v866, %v882
    %v919 = vadd.f32 %v895, %v911
    %v920 = vadd.f32 %v896, %v912
    %v921 = vadd.f32 %v897, %v913
    %v922 = vadd.f32 %v898, %v914
    %v923 = vadd.f32 %v915, %v919
    %v924 = vadd.f32 %v916, %v920
    %v925 = vadd.f32 %v917, %v921
    %v926 = vadd.f32 %v918, %v922
    %928 = vset.pattern.permute.xlu0 0
    %929 = vperm.xlu0 %928, %v59
    %v930 = vpop.permute.xlu0 %929
    %v932 = vadd.f32 %v923, %v930
    %v933 = vadd.f32 %v924, %v930
    %v934 = vadd.f32 %v925, %v930
    %v935 = vadd.f32 %v926, %v930
    %v936 = vmax.f32 %v932, 0.0
    %v937 = vmax.f32 %v933, 0.0
    %v938 = vmax.f32 %v934, 0.0
    %v939 = vmax.f32 %v935, 0.0
    %940 = vrot.lane.b32.xlu0 %v936, 17
    %v941 = vpop.permute.xlu0 %940
    %942 = vrot.lane.b32.xlu0 %v937, 17
    %v943 = vpop.permute.xlu0 %942
    %944 = vrot.lane.b32.xlu0 %v938, 17
    %v945 = vpop.permute.xlu0 %944
    %946 = vrot.lane.b32.xlu0 %v939, 17
    %v947 = vpop.permute.xlu0 %946
    %v948 = vsel %vm85, %v945, %v947
    %v949 = vsel %vm85, %v943, %v945
    %v950 = vsel %vm85, %v941, %v943
    %v951 = vsel %vm85, %v947, %v941
    %v952 = vmul.f32 %v951, %v90
    %v953 = vmul.f32 %v950, %v91
    %v954 = vmul.f32 %v949, %v92
    %v955 = vmul.f32 %v948, %v93
    %957 = vset.pattern.permute.xlu0 0
    %958 = vperm.xlu0 %957, %v60
    %v959 = vpop.permute.xlu0 %958
    %v961 = vperm.slane %v952, 0
    %v962 = vperm.slane %v953, 0
    %v963 = vperm.slane %v954, 0
    %v964 = vperm.slane %v955, 0
    %v965 = vmul.f32 %v959, %v961
    %v966 = vmul.f32 %v959, %v962
    %v967 = vmul.f32 %v959, %v963
    %v968 = vmul.f32 %v959, %v964
    %969 = vset.pattern.permute.xlu0 1
    %970 = vperm.xlu0 %969, %v60
    %v971 = vpop.permute.xlu0 %970
    %v973 = vperm.slane %v952, 1
    %v974 = vperm.slane %v953, 1
    %v975 = vperm.slane %v954, 1
    %v976 = vperm.slane %v955, 1
    %v977 = vmul.f32 %v971, %v973
    %v978 = vmul.f32 %v971, %v974
    %v979 = vmul.f32 %v971, %v975
    %v980 = vmul.f32 %v971, %v976
    %981 = vset.pattern.permute.xlu0 2
    %982 = vperm.xlu0 %981, %v60
    %v983 = vpop.permute.xlu0 %982
    %v985 = vperm.slane %v952, 2
    %v986 = vperm.slane %v953, 2
    %v987 = vperm.slane %v954, 2
    %v988 = vperm.slane %v955, 2
    %v989 = vmul.f32 %v983, %v985
    %v990 = vmul.f32 %v983, %v986
    %v991 = vmul.f32 %v983, %v987
    %v992 = vmul.f32 %v983, %v988
    %993 = vset.pattern.permute.xlu0 3
    %994 = vperm.xlu0 %993, %v60
    %v995 = vpop.permute.xlu0 %994
    %v997 = vperm.slane %v952, 3
    %v998 = vperm.slane %v953, 3
    %v999 = vperm.slane %v954, 3
    %v1000 = vperm.slane %v955, 3
    %v1001 = vmul.f32 %v995, %v997
    %v1002 = vmul.f32 %v995, %v998
    %v1003 = vmul.f32 %v995, %v999
    %v1004 = vmul.f32 %v995, %v1000
    %1005 = vrot.lane.b32.xlu0 %v936, 16
    %v1006 = vpop.permute.xlu0 %1005
    %1007 = vrot.lane.b32.xlu0 %v937, 16
    %v1008 = vpop.permute.xlu0 %1007
    %1009 = vrot.lane.b32.xlu0 %v938, 16
    %v1010 = vpop.permute.xlu0 %1009
    %1011 = vrot.lane.b32.xlu0 %v939, 16
    %v1012 = vpop.permute.xlu0 %1011
    %v1013 = vsel %vm166, %v1010, %v1012
    %v1014 = vsel %vm166, %v1008, %v1010
    %v1015 = vsel %vm166, %v1006, %v1008
    %v1016 = vsel %vm166, %v1012, %v1006
    %v1017 = vmul.f32 %v1016, %v171
    %v1018 = vmul.f32 %v1015, %v172
    %v1019 = vmul.f32 %v1014, %v173
    %v1020 = vmul.f32 %v1013, %v174
    %1021 = vset.pattern.permute.xlu0 4
    %1022 = vperm.xlu0 %1021, %v60
    %v1023 = vpop.permute.xlu0 %1022
    %v1025 = vperm.slane %v1017, 0
    %v1026 = vperm.slane %v1018, 0
    %v1027 = vperm.slane %v1019, 0
    %v1028 = vperm.slane %v1020, 0
    %v1029 = vmul.f32 %v1023, %v1025
    %v1030 = vmul.f32 %v1023, %v1026
    %v1031 = vmul.f32 %v1023, %v1027
    %v1032 = vmul.f32 %v1023, %v1028
    %v1033 = vadd.f32 %v965, %v1029
    %v1034 = vadd.f32 %v966, %v1030
    %v1035 = vadd.f32 %v967, %v1031
    %v1036 = vadd.f32 %v968, %v1032
    %1037 = vset.pattern.permute.xlu0 5
    %1038 = vperm.xlu0 %1037, %v60
    %v1039 = vpop.permute.xlu0 %1038
    %v1041 = vperm.slane %v1017, 1
    %v1042 = vperm.slane %v1018, 1
    %v1043 = vperm.slane %v1019, 1
    %v1044 = vperm.slane %v1020, 1
    %v1045 = vmul.f32 %v1039, %v1041
    %v1046 = vmul.f32 %v1039, %v1042
    %v1047 = vmul.f32 %v1039, %v1043
    %v1048 = vmul.f32 %v1039, %v1044
    %v1049 = vadd.f32 %v977, %v1045
    %v1050 = vadd.f32 %v978, %v1046
    %v1051 = vadd.f32 %v979, %v1047
    %v1052 = vadd.f32 %v980, %v1048
    %1053 = vset.pattern.permute.xlu0 6
    %1054 = vperm.xlu0 %1053, %v60
    %v1055 = vpop.permute.xlu0 %1054
    %v1057 = vperm.slane %v1017, 2
    %v1058 = vperm.slane %v1018, 2
    %v1059 = vperm.slane %v1019, 2
    %v1060 = vperm.slane %v1020, 2
    %v1061 = vmul.f32 %v1055, %v1057
    %v1062 = vmul.f32 %v1055, %v1058
    %v1063 = vmul.f32 %v1055, %v1059
    %v1064 = vmul.f32 %v1055, %v1060
    %v1065 = vadd.f32 %v989, %v1061
    %v1066 = vadd.f32 %v990, %v1062
    %v1067 = vadd.f32 %v991, %v1063
    %v1068 = vadd.f32 %v992, %v1064
    %1069 = vset.pattern.permute.xlu0 7
    %1070 = vperm.xlu0 %1069, %v60
    %v1071 = vpop.permute.xlu0 %1070
    %v1073 = vperm.slane %v1017, 3
    %v1074 = vperm.slane %v1018, 3
    %v1075 = vperm.slane %v1019, 3
    %v1076 = vperm.slane %v1020, 3
    %v1077 = vmul.f32 %v1071, %v1073
    %v1078 = vmul.f32 %v1071, %v1074
    %v1079 = vmul.f32 %v1071, %v1075
    %v1080 = vmul.f32 %v1071, %v1076
    %v1081 = vadd.f32 %v1001, %v1077
    %v1082 = vadd.f32 %v1002, %v1078
    %v1083 = vadd.f32 %v1003, %v1079
    %v1084 = vadd.f32 %v1004, %v1080
    %1085 = vrot.lane.b32.xlu0 %v936, 15
    %v1086 = vpop.permute.xlu0 %1085
    %1087 = vrot.lane.b32.xlu0 %v937, 15
    %v1088 = vpop.permute.xlu0 %1087
    %1089 = vrot.lane.b32.xlu0 %v938, 15
    %v1090 = vpop.permute.xlu0 %1089
    %1091 = vrot.lane.b32.xlu0 %v939, 15
    %v1092 = vpop.permute.xlu0 %1091
    %v1093 = vsel %vm262, %v1090, %v1092
    %v1094 = vsel %vm262, %v1088, %v1090
    %v1095 = vsel %vm262, %v1086, %v1088
    %v1096 = vsel %vm262, %v1092, %v1086
    %v1097 = vmul.f32 %v1096, %v267
    %v1098 = vmul.f32 %v1095, %v268
    %v1099 = vmul.f32 %v1094, %v269
    %v1100 = vmul.f32 %v1093, %v270
    %1101 = vset.pattern.permute.xlu0 8
    %1102 = vperm.xlu0 %1101, %v60
    %v1103 = vpop.permute.xlu0 %1102
    %v1105 = vperm.slane %v1097, 0
    %v1106 = vperm.slane %v1098, 0
    %v1107 = vperm.slane %v1099, 0
    %v1108 = vperm.slane %v1100, 0
    %v1109 = vmul.f32 %v1103, %v1105
    %v1110 = vmul.f32 %v1103, %v1106
    %v1111 = vmul.f32 %v1103, %v1107
    %v1112 = vmul.f32 %v1103, %v1108
    %v1113 = vadd.f32 %v1033, %v1109
    %v1114 = vadd.f32 %v1034, %v1110
    %v1115 = vadd.f32 %v1035, %v1111
    %v1116 = vadd.f32 %v1036, %v1112
    %1117 = vset.pattern.permute.xlu0 9
    %1118 = vperm.xlu0 %1117, %v60
    %v1119 = vpop.permute.xlu0 %1118
    %v1121 = vperm.slane %v1097, 1
    %v1122 = vperm.slane %v1098, 1
    %v1123 = vperm.slane %v1099, 1
    %v1124 = vperm.slane %v1100, 1
    %v1125 = vmul.f32 %v1119, %v1121
    %v1126 = vmul.f32 %v1119, %v1122
    %v1127 = vmul.f32 %v1119, %v1123
    %v1128 = vmul.f32 %v1119, %v1124
    %v1129 = vadd.f32 %v1049, %v1125
    %v1130 = vadd.f32 %v1050, %v1126
    %v1131 = vadd.f32 %v1051, %v1127
    %v1132 = vadd.f32 %v1052, %v1128
    %1133 = vset.pattern.permute.xlu0 10
    %1134 = vperm.xlu0 %1133, %v60
    %v1135 = vpop.permute.xlu0 %1134
    %v1137 = vperm.slane %v1097, 2
    %v1138 = vperm.slane %v1098, 2
    %v1139 = vperm.slane %v1099, 2
    %v1140 = vperm.slane %v1100, 2
    %v1141 = vmul.f32 %v1135, %v1137
    %v1142 = vmul.f32 %v1135, %v1138
    %v1143 = vmul.f32 %v1135, %v1139
    %v1144 = vmul.f32 %v1135, %v1140
    %v1145 = vadd.f32 %v1065, %v1141
    %v1146 = vadd.f32 %v1066, %v1142
    %v1147 = vadd.f32 %v1067, %v1143
    %v1148 = vadd.f32 %v1068, %v1144
    %1149 = vset.pattern.permute.xlu0 11
    %1150 = vperm.xlu0 %1149, %v60
    %v1151 = vpop.permute.xlu0 %1150
    %v1153 = vperm.slane %v1097, 3
    %v1154 = vperm.slane %v1098, 3
    %v1155 = vperm.slane %v1099, 3
    %v1156 = vperm.slane %v1100, 3
    %v1157 = vmul.f32 %v1151, %v1153
    %v1158 = vmul.f32 %v1151, %v1154
    %v1159 = vmul.f32 %v1151, %v1155
    %v1160 = vmul.f32 %v1151, %v1156
    %v1161 = vadd.f32 %v1081, %v1157
    %v1162 = vadd.f32 %v1082, %v1158
    %v1163 = vadd.f32 %v1083, %v1159
    %v1164 = vadd.f32 %v1084, %v1160
    %1165 = vrot.lane.b32.xlu0 %v936, 1
    %v1166 = vpop.permute.xlu0 %1165
    %1167 = vrot.lane.b32.xlu0 %v937, 1
    %v1168 = vpop.permute.xlu0 %1167
    %1169 = vrot.lane.b32.xlu0 %v938, 1
    %v1170 = vpop.permute.xlu0 %1169
    %1171 = vrot.lane.b32.xlu0 %v939, 1
    %v1172 = vpop.permute.xlu0 %1171
    %v1173 = vsel %vm358, %v1170, %v1172
    %v1174 = vsel %vm358, %v1168, %v1170
    %v1175 = vsel %vm358, %v1166, %v1168
    %v1176 = vsel %vm358, %v1172, %v1166
    %v1177 = vmul.f32 %v1176, %v363
    %v1178 = vmul.f32 %v1175, %v364
    %v1179 = vmul.f32 %v1174, %v365
    %v1180 = vmul.f32 %v1173, %v366
    %1181 = vset.pattern.permute.xlu0 12
    %1182 = vperm.xlu0 %1181, %v60
    %v1183 = vpop.permute.xlu0 %1182
    %v1185 = vperm.slane %v1177, 0
    %v1186 = vperm.slane %v1178, 0
    %v1187 = vperm.slane %v1179, 0
    %v1188 = vperm.slane %v1180, 0
    %v1189 = vmul.f32 %v1183, %v1185
    %v1190 = vmul.f32 %v1183, %v1186
    %v1191 = vmul.f32 %v1183, %v1187
    %v1192 = vmul.f32 %v1183, %v1188
    %v1193 = vadd.f32 %v1113, %v1189
    %v1194 = vadd.f32 %v1114, %v1190
    %v1195 = vadd.f32 %v1115, %v1191
    %v1196 = vadd.f32 %v1116, %v1192
    %1197 = vset.pattern.permute.xlu0 13
    %1198 = vperm.xlu0 %1197, %v60
    %v1199 = vpop.permute.xlu0 %1198
    %v1201 = vperm.slane %v1177, 1
    %v1202 = vperm.slane %v1178, 1
    %v1203 = vperm.slane %v1179, 1
    %v1204 = vperm.slane %v1180, 1
    %v1205 = vmul.f32 %v1199, %v1201
    %v1206 = vmul.f32 %v1199, %v1202
    %v1207 = vmul.f32 %v1199, %v1203
    %v1208 = vmul.f32 %v1199, %v1204
    %v1209 = vadd.f32 %v1129, %v1205
    %v1210 = vadd.f32 %v1130, %v1206
    %v1211 = vadd.f32 %v1131, %v1207
    %v1212 = vadd.f32 %v1132, %v1208
    %1213 = vset.pattern.permute.xlu0 14
    %1214 = vperm.xlu0 %1213, %v60
    %v1215 = vpop.permute.xlu0 %1214
    %v1217 = vperm.slane %v1177, 2
    %v1218 = vperm.slane %v1178, 2
    %v1219 = vperm.slane %v1179, 2
    %v1220 = vperm.slane %v1180, 2
    %v1221 = vmul.f32 %v1215, %v1217
    %v1222 = vmul.f32 %v1215, %v1218
    %v1223 = vmul.f32 %v1215, %v1219
    %v1224 = vmul.f32 %v1215, %v1220
    %v1225 = vadd.f32 %v1145, %v1221
    %v1226 = vadd.f32 %v1146, %v1222
    %v1227 = vadd.f32 %v1147, %v1223
    %v1228 = vadd.f32 %v1148, %v1224
    %1229 = vset.pattern.permute.xlu0 15
    %1230 = vperm.xlu0 %1229, %v60
    %v1231 = vpop.permute.xlu0 %1230
    %v1233 = vperm.slane %v1177, 3
    %v1234 = vperm.slane %v1178, 3
    %v1235 = vperm.slane %v1179, 3
    %v1236 = vperm.slane %v1180, 3
    %v1237 = vmul.f32 %v1231, %v1233
    %v1238 = vmul.f32 %v1231, %v1234
    %v1239 = vmul.f32 %v1231, %v1235
    %v1240 = vmul.f32 %v1231, %v1236
    %v1241 = vadd.f32 %v1161, %v1237
    %v1242 = vadd.f32 %v1162, %v1238
    %v1243 = vadd.f32 %v1163, %v1239
    %v1244 = vadd.f32 %v1164, %v1240
    %1245 = vset.pattern.permute.xlu0 16
    %1246 = vperm.xlu0 %1245, %v60
    %v1247 = vpop.permute.xlu0 %1246
    %v1249 = vperm.slane %v936, 0
    %v1250 = vperm.slane %v937, 0
    %v1251 = vperm.slane %v938, 0
    %v1252 = vperm.slane %v939, 0
    %v1253 = vmul.f32 %v1247, %v1249
    %v1254 = vmul.f32 %v1247, %v1250
    %v1255 = vmul.f32 %v1247, %v1251
    %v1256 = vmul.f32 %v1247, %v1252
    %v1257 = vadd.f32 %v1193, %v1253
    %v1258 = vadd.f32 %v1194, %v1254
    %v1259 = vadd.f32 %v1195, %v1255
    %v1260 = vadd.f32 %v1196, %v1256
    %1261 = vset.pattern.permute.xlu0 17
    %1262 = vperm.xlu0 %1261, %v60
    %v1263 = vpop.permute.xlu0 %1262
    %v1265 = vperm.slane %v936, 1
    %v1266 = vperm.slane %v937, 1
    %v1267 = vperm.slane %v938, 1
    %v1268 = vperm.slane %v939, 1
    %v1269 = vmul.f32 %v1263, %v1265
    %v1270 = vmul.f32 %v1263, %v1266
    %v1271 = vmul.f32 %v1263, %v1267
    %v1272 = vmul.f32 %v1263, %v1268
    %v1273 = vadd.f32 %v1209, %v1269
    %v1274 = vadd.f32 %v1210, %v1270
    %v1275 = vadd.f32 %v1211, %v1271
    %v1276 = vadd.f32 %v1212, %v1272
    %1277 = vset.pattern.permute.xlu0 18
    %1278 = vperm.xlu0 %1277, %v60
    %v1279 = vpop.permute.xlu0 %1278
    %v1281 = vperm.slane %v936, 2
    %v1282 = vperm.slane %v937, 2
    %v1283 = vperm.slane %v938, 2
    %v1284 = vperm.slane %v939, 2
    %v1285 = vmul.f32 %v1279, %v1281
    %v1286 = vmul.f32 %v1279, %v1282
    %v1287 = vmul.f32 %v1279, %v1283
    %v1288 = vmul.f32 %v1279, %v1284
    %v1289 = vadd.f32 %v1225, %v1285
    %v1290 = vadd.f32 %v1226, %v1286
    %v1291 = vadd.f32 %v1227, %v1287
    %v1292 = vadd.f32 %v1228, %v1288
    %1293 = vset.pattern.permute.xlu0 19
    %1294 = vperm.xlu0 %1293, %v60
    %v1295 = vpop.permute.xlu0 %1294
    %v1297 = vperm.slane %v936, 3
    %v1298 = vperm.slane %v937, 3
    %v1299 = vperm.slane %v938, 3
    %v1300 = vperm.slane %v939, 3
    %v1301 = vmul.f32 %v1295, %v1297
    %v1302 = vmul.f32 %v1295, %v1298
    %v1303 = vmul.f32 %v1295, %v1299
    %v1304 = vmul.f32 %v1295, %v1300
    %v1305 = vadd.f32 %v1241, %v1301
    %v1306 = vadd.f32 %v1242, %v1302
    %v1307 = vadd.f32 %v1243, %v1303
    %v1308 = vadd.f32 %v1244, %v1304
    %1309 = vrot.lane.b32.xlu0 %v936, 127
    %v1310 = vpop.permute.xlu0 %1309
    %1311 = vrot.lane.b32.xlu0 %v937, 127
    %v1312 = vpop.permute.xlu0 %1311
    %1313 = vrot.lane.b32.xlu0 %v938, 127
    %v1314 = vpop.permute.xlu0 %1313
    %1315 = vrot.lane.b32.xlu0 %v939, 127
    %v1316 = vpop.permute.xlu0 %1315
    %v1317 = vsel %vm550, %v1314, %v1316
    %v1318 = vsel %vm550, %v1312, %v1314
    %v1319 = vsel %vm550, %v1310, %v1312
    %v1320 = vsel %vm550, %v1316, %v1310
    %v1321 = vmul.f32 %v1319, %v555
    %v1322 = vmul.f32 %v1318, %v556
    %v1323 = vmul.f32 %v1317, %v557
    %v1324 = vmul.f32 %v1320, %v558
    %1325 = vset.pattern.permute.xlu0 20
    %1326 = vperm.xlu0 %1325, %v60
    %v1327 = vpop.permute.xlu0 %1326
    %v1329 = vperm.slane %v1321, 0
    %v1330 = vperm.slane %v1322, 0
    %v1331 = vperm.slane %v1323, 0
    %v1332 = vperm.slane %v1324, 0
    %v1333 = vmul.f32 %v1327, %v1329
    %v1334 = vmul.f32 %v1327, %v1330
    %v1335 = vmul.f32 %v1327, %v1331
    %v1336 = vmul.f32 %v1327, %v1332
    %v1337 = vadd.f32 %v1257, %v1333
    %v1338 = vadd.f32 %v1258, %v1334
    %v1339 = vadd.f32 %v1259, %v1335
    %v1340 = vadd.f32 %v1260, %v1336
    %1341 = vset.pattern.permute.xlu0 21
    %1342 = vperm.xlu0 %1341, %v60
    %v1343 = vpop.permute.xlu0 %1342
    %v1345 = vperm.slane %v1321, 1
    %v1346 = vperm.slane %v1322, 1
    %v1347 = vperm.slane %v1323, 1
    %v1348 = vperm.slane %v1324, 1
    %v1349 = vmul.f32 %v1343, %v1345
    %v1350 = vmul.f32 %v1343, %v1346
    %v1351 = vmul.f32 %v1343, %v1347
    %v1352 = vmul.f32 %v1343, %v1348
    %v1353 = vadd.f32 %v1273, %v1349
    %v1354 = vadd.f32 %v1274, %v1350
    %v1355 = vadd.f32 %v1275, %v1351
    %v1356 = vadd.f32 %v1276, %v1352
    %1357 = vset.pattern.permute.xlu0 22
    %1358 = vperm.xlu0 %1357, %v60
    %v1359 = vpop.permute.xlu0 %1358
    %v1361 = vperm.slane %v1321, 2
    %v1362 = vperm.slane %v1322, 2
    %v1363 = vperm.slane %v1323, 2
    %v1364 = vperm.slane %v1324, 2
    %v1365 = vmul.f32 %v1359, %v1361
    %v1366 = vmul.f32 %v1359, %v1362
    %v1367 = vmul.f32 %v1359, %v1363
    %v1368 = vmul.f32 %v1359, %v1364
    %v1369 = vadd.f32 %v1289, %v1365
    %v1370 = vadd.f32 %v1290, %v1366
    %v1371 = vadd.f32 %v1291, %v1367
    %v1372 = vadd.f32 %v1292, %v1368
    %1373 = vset.pattern.permute.xlu0 23
    %1374 = vperm.xlu0 %1373, %v60
    %v1375 = vpop.permute.xlu0 %1374
    %v1377 = vperm.slane %v1321, 3
    %v1378 = vperm.slane %v1322, 3
    %v1379 = vperm.slane %v1323, 3
    %v1380 = vperm.slane %v1324, 3
    %v1381 = vmul.f32 %v1375, %v1377
    %v1382 = vmul.f32 %v1375, %v1378
    %v1383 = vmul.f32 %v1375, %v1379
    %v1384 = vmul.f32 %v1375, %v1380
    %v1385 = vadd.f32 %v1305, %v1381
    %v1386 = vadd.f32 %v1306, %v1382
    %v1387 = vadd.f32 %v1307, %v1383
    %v1388 = vadd.f32 %v1308, %v1384
    %1389 = vrot.lane.b32.xlu0 %v936, 113
    %v1390 = vpop.permute.xlu0 %1389
    %1391 = vrot.lane.b32.xlu0 %v937, 113
    %v1392 = vpop.permute.xlu0 %1391
    %1393 = vrot.lane.b32.xlu0 %v938, 113
    %v1394 = vpop.permute.xlu0 %1393
    %1395 = vrot.lane.b32.xlu0 %v939, 113
    %v1396 = vpop.permute.xlu0 %1395
    %v1397 = vsel %vm646, %v1394, %v1396
    %v1398 = vsel %vm646, %v1392, %v1394
    %v1399 = vsel %vm646, %v1390, %v1392
    %v1400 = vsel %vm646, %v1396, %v1390
    %v1401 = vmul.f32 %v1399, %v651
    %v1402 = vmul.f32 %v1398, %v652
    %v1403 = vmul.f32 %v1397, %v653
    %v1404 = vmul.f32 %v1400, %v654
    %1405 = vset.pattern.permute.xlu0 24
    %1406 = vperm.xlu0 %1405, %v60
    %v1407 = vpop.permute.xlu0 %1406
    %v1409 = vperm.slane %v1401, 0
    %v1410 = vperm.slane %v1402, 0
    %v1411 = vperm.slane %v1403, 0
    %v1412 = vperm.slane %v1404, 0
    %v1413 = vmul.f32 %v1407, %v1409
    %v1414 = vmul.f32 %v1407, %v1410
    %v1415 = vmul.f32 %v1407, %v1411
    %v1416 = vmul.f32 %v1407, %v1412
    %v1417 = vadd.f32 %v1337, %v1413
    %v1418 = vadd.f32 %v1338, %v1414
    %v1419 = vadd.f32 %v1339, %v1415
    %v1420 = vadd.f32 %v1340, %v1416
    %1421 = vset.pattern.permute.xlu0 25
    %1422 = vperm.xlu0 %1421, %v60
    %v1423 = vpop.permute.xlu0 %1422
    %v1425 = vperm.slane %v1401, 1
    %v1426 = vperm.slane %v1402, 1
    %v1427 = vperm.slane %v1403, 1
    %v1428 = vperm.slane %v1404, 1
    %v1429 = vmul.f32 %v1423, %v1425
    %v1430 = vmul.f32 %v1423, %v1426
    %v1431 = vmul.f32 %v1423, %v1427
    %v1432 = vmul.f32 %v1423, %v1428
    %v1433 = vadd.f32 %v1353, %v1429
    %v1434 = vadd.f32 %v1354, %v1430
    %v1435 = vadd.f32 %v1355, %v1431
    %v1436 = vadd.f32 %v1356, %v1432
    %1437 = vset.pattern.permute.xlu0 26
    %1438 = vperm.xlu0 %1437, %v60
    %v1439 = vpop.permute.xlu0 %1438
    %v1441 = vperm.slane %v1401, 2
    %v1442 = vperm.slane %v1402, 2
    %v1443 = vperm.slane %v1403, 2
    %v1444 = vperm.slane %v1404, 2
    %v1445 = vmul.f32 %v1439, %v1441
    %v1446 = vmul.f32 %v1439, %v1442
    %v1447 = vmul.f32 %v1439, %v1443
    %v1448 = vmul.f32 %v1439, %v1444
    %v1449 = vadd.f32 %v1369, %v1445
    %v1450 = vadd.f32 %v1370, %v1446
    %v1451 = vadd.f32 %v1371, %v1447
    %v1452 = vadd.f32 %v1372, %v1448
    %1453 = vset.pattern.permute.xlu0 27
    %1454 = vperm.xlu0 %1453, %v60
    %v1455 = vpop.permute.xlu0 %1454
    %v1457 = vperm.slane %v1401, 3
    %v1458 = vperm.slane %v1402, 3
    %v1459 = vperm.slane %v1403, 3
    %v1460 = vperm.slane %v1404, 3
    %v1461 = vmul.f32 %v1455, %v1457
    %v1462 = vmul.f32 %v1455, %v1458
    %v1463 = vmul.f32 %v1455, %v1459
    %v1464 = vmul.f32 %v1455, %v1460
    %v1465 = vadd.f32 %v1385, %v1461
    %v1466 = vadd.f32 %v1386, %v1462
    %v1467 = vadd.f32 %v1387, %v1463
    %v1468 = vadd.f32 %v1388, %v1464
    %1469 = vrot.lane.b32.xlu0 %v936, 112
    %v1470 = vpop.permute.xlu0 %1469
    %1471 = vrot.lane.b32.xlu0 %v937, 112
    %v1472 = vpop.permute.xlu0 %1471
    %1473 = vrot.lane.b32.xlu0 %v938, 112
    %v1474 = vpop.permute.xlu0 %1473
    %1475 = vrot.lane.b32.xlu0 %v939, 112
    %v1476 = vpop.permute.xlu0 %1475
    %v1477 = vsel %vm742, %v1474, %v1476
    %v1478 = vsel %vm742, %v1472, %v1474
    %v1479 = vsel %vm742, %v1470, %v1472
    %v1480 = vsel %vm742, %v1476, %v1470
    %v1481 = vmul.f32 %v1479, %v747
    %v1482 = vmul.f32 %v1478, %v748
    %v1483 = vmul.f32 %v1477, %v749
    %v1484 = vmul.f32 %v1480, %v750
    %1485 = vset.pattern.permute.xlu0 28
    %1486 = vperm.xlu0 %1485, %v60
    %v1487 = vpop.permute.xlu0 %1486
    %v1489 = vperm.slane %v1481, 0
    %v1490 = vperm.slane %v1482, 0
    %v1491 = vperm.slane %v1483, 0
    %v1492 = vperm.slane %v1484, 0
    %v1493 = vmul.f32 %v1487, %v1489
    %v1494 = vmul.f32 %v1487, %v1490
    %v1495 = vmul.f32 %v1487, %v1491
    %v1496 = vmul.f32 %v1487, %v1492
    %v1497 = vadd.f32 %v1417, %v1493
    %v1498 = vadd.f32 %v1418, %v1494
    %v1499 = vadd.f32 %v1419, %v1495
    %v1500 = vadd.f32 %v1420, %v1496
    %1501 = vset.pattern.permute.xlu0 29
    %1502 = vperm.xlu0 %1501, %v60
    %v1503 = vpop.permute.xlu0 %1502
    %v1505 = vperm.slane %v1481, 1
    %v1506 = vperm.slane %v1482, 1
    %v1507 = vperm.slane %v1483, 1
    %v1508 = vperm.slane %v1484, 1
    %v1509 = vmul.f32 %v1503, %v1505
    %v1510 = vmul.f32 %v1503, %v1506
    %v1511 = vmul.f32 %v1503, %v1507
    %v1512 = vmul.f32 %v1503, %v1508
    %v1513 = vadd.f32 %v1433, %v1509
    %v1514 = vadd.f32 %v1434, %v1510
    %v1515 = vadd.f32 %v1435, %v1511
    %v1516 = vadd.f32 %v1436, %v1512
    %1517 = vset.pattern.permute.xlu0 30
    %1518 = vperm.xlu0 %1517, %v60
    %v1519 = vpop.permute.xlu0 %1518
    %v1521 = vperm.slane %v1481, 2
    %v1522 = vperm.slane %v1482, 2
    %v1523 = vperm.slane %v1483, 2
    %v1524 = vperm.slane %v1484, 2
    %v1525 = vmul.f32 %v1519, %v1521
    %v1526 = vmul.f32 %v1519, %v1522
    %v1527 = vmul.f32 %v1519, %v1523
    %v1528 = vmul.f32 %v1519, %v1524
    %v1529 = vadd.f32 %v1449, %v1525
    %v1530 = vadd.f32 %v1450, %v1526
    %v1531 = vadd.f32 %v1451, %v1527
    %v1532 = vadd.f32 %v1452, %v1528
    %1533 = vset.pattern.permute.xlu0 31
    %1534 = vperm.xlu0 %1533, %v60
    %v1535 = vpop.permute.xlu0 %1534
    %v1537 = vperm.slane %v1481, 3
    %v1538 = vperm.slane %v1482, 3
    %v1539 = vperm.slane %v1483, 3
    %v1540 = vperm.slane %v1484, 3
    %v1541 = vmul.f32 %v1535, %v1537
    %v1542 = vmul.f32 %v1535, %v1538
    %v1543 = vmul.f32 %v1535, %v1539
    %v1544 = vmul.f32 %v1535, %v1540
    %v1545 = vadd.f32 %v1465, %v1541
    %v1546 = vadd.f32 %v1466, %v1542
    %v1547 = vadd.f32 %v1467, %v1543
    %v1548 = vadd.f32 %v1468, %v1544
    %1549 = vrot.lane.b32.xlu0 %v936, 111
    %v1550 = vpop.permute.xlu0 %1549
    %1551 = vrot.lane.b32.xlu0 %v937, 111
    %v1552 = vpop.permute.xlu0 %1551
    %1553 = vrot.lane.b32.xlu0 %v938, 111
    %v1554 = vpop.permute.xlu0 %1553
    %1555 = vrot.lane.b32.xlu0 %v939, 111
    %v1556 = vpop.permute.xlu0 %1555
    %v1557 = vsel %vm838, %v1554, %v1556
    %v1558 = vsel %vm838, %v1552, %v1554
    %v1559 = vsel %vm838, %v1550, %v1552
    %v1560 = vsel %vm838, %v1556, %v1550
    %v1561 = vmul.f32 %v1559, %v843
    %v1562 = vmul.f32 %v1558, %v844
    %v1563 = vmul.f32 %v1557, %v845
    %v1564 = vmul.f32 %v1560, %v846
    %1565 = vset.pattern.permute.xlu0 32
    %1566 = vperm.xlu0 %1565, %v60
    %v1567 = vpop.permute.xlu0 %1566
    %v1569 = vperm.slane %v1561, 0
    %v1570 = vperm.slane %v1562, 0
    %v1571 = vperm.slane %v1563, 0
    %v1572 = vperm.slane %v1564, 0
    %v1573 = vmul.f32 %v1567, %v1569
    %v1574 = vmul.f32 %v1567, %v1570
    %v1575 = vmul.f32 %v1567, %v1571
    %v1576 = vmul.f32 %v1567, %v1572
    %v1577 = vadd.f32 %v1497, %v1573
    %v1578 = vadd.f32 %v1498, %v1574
    %v1579 = vadd.f32 %v1499, %v1575
    %v1580 = vadd.f32 %v1500, %v1576
    %1581 = vset.pattern.permute.xlu0 33
    %1582 = vperm.xlu0 %1581, %v60
    %v1583 = vpop.permute.xlu0 %1582
    %v1585 = vperm.slane %v1561, 1
    %v1586 = vperm.slane %v1562, 1
    %v1587 = vperm.slane %v1563, 1
    %v1588 = vperm.slane %v1564, 1
    %v1589 = vmul.f32 %v1583, %v1585
    %v1590 = vmul.f32 %v1583, %v1586
    %v1591 = vmul.f32 %v1583, %v1587
    %v1592 = vmul.f32 %v1583, %v1588
    %v1593 = vadd.f32 %v1513, %v1589
    %v1594 = vadd.f32 %v1514, %v1590
    %v1595 = vadd.f32 %v1515, %v1591
    %v1596 = vadd.f32 %v1516, %v1592
    %1597 = vset.pattern.permute.xlu0 34
    %1598 = vperm.xlu0 %1597, %v60
    %v1599 = vpop.permute.xlu0 %1598
    %v1601 = vperm.slane %v1561, 2
    %v1602 = vperm.slane %v1562, 2
    %v1603 = vperm.slane %v1563, 2
    %v1604 = vperm.slane %v1564, 2
    %v1605 = vmul.f32 %v1599, %v1601
    %v1606 = vmul.f32 %v1599, %v1602
    %v1607 = vmul.f32 %v1599, %v1603
    %v1608 = vmul.f32 %v1599, %v1604
    %v1609 = vadd.f32 %v1529, %v1605
    %v1610 = vadd.f32 %v1530, %v1606
    %v1611 = vadd.f32 %v1531, %v1607
    %v1612 = vadd.f32 %v1532, %v1608
    %1613 = vset.pattern.permute.xlu0 35
    %1614 = vperm.xlu0 %1613, %v60
    %v1615 = vpop.permute.xlu0 %1614
    %v1617 = vperm.slane %v1561, 3
    %v1618 = vperm.slane %v1562, 3
    %v1619 = vperm.slane %v1563, 3
    %v1620 = vperm.slane %v1564, 3
    %v1621 = vmul.f32 %v1615, %v1617
    %v1622 = vmul.f32 %v1615, %v1618
    %v1623 = vmul.f32 %v1615, %v1619
    %v1624 = vmul.f32 %v1615, %v1620
    %v1625 = vadd.f32 %v1545, %v1621
    %v1626 = vadd.f32 %v1546, %v1622
    %v1627 = vadd.f32 %v1547, %v1623
    %v1628 = vadd.f32 %v1548, %v1624
    %v1629 = vadd.f32 %v1577, %v1593
    %v1630 = vadd.f32 %v1578, %v1594
    %v1631 = vadd.f32 %v1579, %v1595
    %v1632 = vadd.f32 %v1580, %v1596
    %v1633 = vadd.f32 %v1609, %v1625
    %v1634 = vadd.f32 %v1610, %v1626
    %v1635 = vadd.f32 %v1611, %v1627
    %v1636 = vadd.f32 %v1612, %v1628
    %v1637 = vadd.f32 %v1629, %v1633
    %v1638 = vadd.f32 %v1630, %v1634
    %v1639 = vadd.f32 %v1631, %v1635
    %v1640 = vadd.f32 %v1632, %v1636
    %1642 = vset.pattern.permute.xlu0 0
    %1643 = vperm.xlu0 %1642, %v61
    %v1644 = vpop.permute.xlu0 %1643
    %v1646 = vadd.f32 %v1637, %v1644
    %v1647 = vadd.f32 %v1638, %v1644
    %v1648 = vadd.f32 %v1639, %v1644
    %v1649 = vadd.f32 %v1640, %v1644
    %1650 = vst [vmem:[#allocation1] ss:$2 sm:$0xff] %v56
    %s1651 = scalar_lea.vmem [#allocation1], 16
    %1652 = vst [vmem:[%s1651] ss:$2 sm:$0xff] %v57
    %v1653 = vld.sshfl [vmem:[#allocation1] sm:$0xff pattern:$0x75316420]
    %v1654 = vld.sshfl [vmem:[#allocation1 + $0x8] sm:$0xff pattern:$0x75316420]
    %v1655 = vld.sshfl [vmem:[#allocation1 + $0x10] sm:$0xff pattern:$0x75316420]
    %v1656 = vld.sshfl [vmem:[#allocation1 + $0x18] sm:$0xff pattern:$0x75316420]
    %v1661 = vadd.f32 %v1646, %v1653
    %v1662 = vadd.f32 %v1647, %v1654
    %v1663 = vadd.f32 %v1648, %v1655
    %v1664 = vadd.f32 %v1649, %v1656
    %v1669 = vrot.slane %v1662, 4
    %v1670 = vrot.slane %v1664, 4
    %vm1671 = vcmask 1043456
    %v1672 = vsel %vm1671, %v1661, %v1669
    %v1673 = vsel %vm1671, %v1663, %v1670
    %1676 = vst [vmem:[#allocation7] sm:$0xff] %v1672
    %1677 = vst [vmem:[#allocation7 + $0x8] sm:$0xff] %v1673
    // Predicated region
    $region34: #{tpu_custom_call.1} parent=1 // pred_check
      _
    $region35: #{tpu_custom_call.1} parent=1 // pred_check_branch
      %1679 = sbr.rel (0) target = $region37
    $region36: #{tpu_custom_call.1} parent=1 // pred_region
      %1681 = vsyncadd [#allocation4], 0
      %s1683 = sshll.u32 [#allocation7], 4
      %s1684 = int_to_ptr.vmem [resolvable:$true] %s1683
      %s1685 = sshll.u32 %s6, 4
      %s1686 = int_to_ptr.hbm [resolvable:$true] %s1685
      %1688 = dma.vmem_to_hbm [thread:$0]  %s1684, 256, %s1686, [#allocation4]
    $region37: #{tpu_custom_call.1} parent=1 // pred_fallthru
      _
    // Predicated region
    $region38: #{tpu_custom_call.1} parent=1 // pred_check
      _
    $region39: #{tpu_custom_call.1} parent=1 // pred_check_branch
      %1690 = sbr.rel (0) target = $region41
    $region40: #{tpu_custom_call.1} parent=1 // pred_region
      %1692 = dma.done [#allocation4], 256
    $region41: #{tpu_custom_call.1} parent=1 // pred_fallthru
      _
    %1693 = vsyncpa [#allocation3], 1
    %1694 = vsyncpa [#allocation6], 1
    %1695 = vsyncpa [#allocation4], 1

</llo_original>
